<compile_context>
chip_gen: v6e
topology: v6e:2x2x1
jax: 0.10.0
libtpu: 0.0.40
codegen_flags: <defaults>
</compile_context>

<pallas_src>
import functools

import jax
import jax.numpy as jnp
from jax import lax
from jax.experimental import pallas as pl
from jax.experimental.pallas import tpu as pltpu

BN_EPS = 1e-5


def _round_up(x, m):
    return (x + m - 1) // m * m


def _vmem_capacity_bytes():
    try:
        info = pltpu.get_tpu_info()
        cap = int(getattr(info, "vmem_capacity_bytes", 0))
        if cap > 0:
            return cap
    except Exception:
        pass
    return 128 * 1024 * 1024  # v5e / v6e physical VMEM fallback


def _pick_th(h_out, wp, cin_p, kcp, cout, cout_pad, lext, scoped_vmem):
    """Output rows per conv grid step.

    Candidates are divisors of h_out that are multiples of 8 (keeps the BN-apply output block
    (1, Cout, th, Wout) sublane-legal) or h_out itself.  Pick the largest one whose per-step
    VMEM footprint fits the scoped budget and whose f32 accumulator stays modest.
    """
    acc_cap = 512 * 1024
    budget = int(scoped_vmem * 0.8)
    # residency independent of th (double-buffered inputs: image, weights, mask)
    fixed = (_round_up(cin_p, 16) * _round_up(lext, 128) * 2 * 2
             + cout_pad * _round_up(kcp, 128) * 2 * 2
             + 8 * 1024)

    def step_bytes(t):
        lanes = _round_up(t * wp, 128)
        slab = _round_up(kcp, 16) * lanes * 2            # bf16 im2col slab scratch
        acc = cout_pad * lanes * 4                       # f32 accumulator
        yblk = _round_up(cout, 16) * lanes * 2 * 2       # bf16 output tile, double buffered
        ps = cout_pad * 128 * 4 * 2
        return slab + acc + yblk + ps, acc

    cands = [t for t in range(1, h_out + 1)
             if h_out % t == 0 and (t % 8 == 0 or t == h_out)]
    fitting = []
    for t in cands:
        sb, acc = step_bytes(t)
        if fixed + sb <= budget and acc <= acc_cap:
            fitting.append(t)
    # TODO(synk): if nothing fits (huge images on v7x's 64 MiB VMEM) the input should be
    # halo-streamed in row blocks instead of keeping the whole padded frame resident.
    return max(fitting) if fitting else min(cands)


@functools.partial(jax.jit, static_argnames=("kernel_size", "padding"))
def lightweight_conv2d(x_nchw, conv_w, gamma, beta, *, kernel_size=3, padding=1):
    """Conv2d(k, stride=1, padding, bias=False) -> BatchNorm2d (batch stats) -> ReLU.

    x_nchw: (N, Cin, H, W) f32; conv_w: (Cout, Cin, KH, KW); gamma/beta: (Cout,).
    Returns (N, Cout, Hout, Wout) f32.
    """
    N, Cin, H, W = x_nchw.shape
    Cout, _, KH, KW = conv_w.shape
    assert KH == KW == kernel_size
    Hout = H + 2 * padding - KH + 1
    Wout = W + 2 * padding - KW + 1
    Hp, Wp = H + 2 * padding, W + 2 * padding
    Hpp = Hp + 1                     # one extra zero row keeps every flat tap slice in bounds
    Lext = Hpp * Wp

    cout_pad = _round_up(Cout, 128)  # MXU N dim: multiple of the 128 quantum on all generations
    cin_p = _round_up(Cin, 16)       # bf16 sublane-tile aligned slab chunks
    kcp = KH * KW * cin_p            # contraction depth of the single im2col matmul

    scoped_vmem = min(_vmem_capacity_bytes() * 3 // 4, 96 * 1024 * 1024)
    th = _pick_th(Hout, Wp, cin_p, kcp, Cout, cout_pad, Lext, scoped_vmem)
    n_hb = Hout // th
    tlp = th * Wp                    # lanes of one conv tile (padded width -> KW-1 junk cols/row)

    # ---- layout plumbing (NO activation transpose): pad NCHW directly, flatten HW ----
    x_pad = jnp.pad(x_nchw.astype(jnp.bfloat16),
                    ((0, 0), (0, cin_p - Cin), (padding, padding + 1), (padding, padding)))
    x_flat = x_pad.reshape(N, cin_p, Lext)

    # (Cout, Cin, KH, KW) -> (cout_pad, KH*KW*cin_p), channel-minor per tap, zero-padded.
    w_t = jnp.transpose(conv_w, (0, 2, 3, 1))                               # (Cout, KH, KW, Cin)
    w_t = jnp.pad(w_t, ((0, cout_pad - Cout), (0, 0), (0, 0), (0, cin_p - Cin)))
    w2 = w_t.reshape(cout_pad, kcp).astype(jnp.bfloat16)

    # 0/1 mask over the tile lanes marking real output columns (padded-width junk -> 0).
    colmask = ((jnp.arange(tlp) % Wp) < Wout).astype(jnp.float32).reshape(1, tlp)

    # ---------------- kernel 1: fused im2col conv (single MXU matmul) + BN statistics ----------
    def conv_kernel(x_ref, w_ref, m_ref, y_ref, ps_ref, slab_ref):
        # x_ref   : (1, cin_p, Lext)     bf16  flat zero-padded image (resident across hb)
        # w_ref   : (cout_pad, kcp)      bf16  im2col-flattened weights
        # m_ref   : (1, tlp)             f32   valid-column mask
        # y_ref   : (1, 1, Cout, tlp)    bf16  channel-major conv tile (padded-width lanes)
        # ps_ref  : (1, 1, cout_pad, 2)  f32   per-tile BN partial sums
        # slab_ref: (kcp, tlp)           bf16  im2col slab scratch
        base = 0 if n_hb == 1 else pl.program_id(1) * tlp
        for dh in range(KH):
            for dw in range(KW):
                k = dh * KW + dw
                off = base + dh * Wp + dw
                slab_ref[pl.ds(k * cin_p, cin_p), :] = x_ref[0, :, pl.ds(off, tlp)]
        # One matmul with K = KH*KW*cin_p, computed channel-major (no epilogue transpose).
        acc = jnp.dot(w_ref[...], slab_ref[...], preferred_element_type=jnp.float32)
        # BN batch statistics from the f32 accumulator; junk columns masked out.
        accv = acc * m_ref[...]
        ps_ref[0, 0, :, 0:1] = jnp.sum(accv, axis=1, keepdims=True)
        ps_ref[0, 0, :, 1:2] = jnp.sum(accv * accv, axis=1, keepdims=True)
        # lane-dense, channel-major bf16 store (read back exactly once by kernel 2).
        y_ref[0, 0] = acc[:Cout, :].astype(jnp.bfloat16)

    conv_cost = pl.CostEstimate(
        flops=2 * N * n_hb * cout_pad * tlp * kcp,
        transcendentals=0,
        bytes_accessed=(x_flat.size * 2 + w2.size * 2
                        + N * n_hb * Cout * tlp * 2 + N * n_hb * cout_pad * 2 * 4))

    y_t, ps = pl.pallas_call(
        conv_kernel,
        out_shape=(
            jax.ShapeDtypeStruct((N, n_hb, Cout, tlp), jnp.bfloat16),
            jax.ShapeDtypeStruct((N, n_hb, cout_pad, 2), jnp.float32),
        ),
        grid_spec=pltpu.PrefetchScalarGridSpec(
            num_scalar_prefetch=0,
            grid=(N, n_hb),
            in_specs=[
                pl.BlockSpec((1, cin_p, Lext), lambda n, hb: (n, 0, 0)),
                pl.BlockSpec((cout_pad, kcp), lambda n, hb: (0, 0)),
                pl.BlockSpec((1, tlp), lambda n, hb: (0, 0)),
            ],
            out_specs=[
                pl.BlockSpec((1, 1, Cout, tlp), lambda n, hb: (n, hb, 0, 0)),
                pl.BlockSpec((1, 1, cout_pad, 2), lambda n, hb: (n, hb, 0, 0)),
            ],
            scratch_shapes=[pltpu.VMEM((kcp, tlp), jnp.bfloat16)],
        ),
        compiler_params=pltpu.CompilerParams(
            dimension_semantics=("parallel", "arbitrary"),
            vmem_limit_bytes=scoped_vmem),
        cost_estimate=conv_cost,
    )(x_flat, w2, colmask)

    # ---- tiny global stats combine -> per-channel scale/shift (train-mode batch stats) ----
    cnt = jnp.asarray(N * Hout * Wout, jnp.float32)
    sums = jnp.sum(ps, axis=(0, 1))                        # (cout_pad, 2)
    mean = sums[:Cout, 0] / cnt
    # TODO(synk): E[x^2]-E[x]^2 in f32 is cancellation-prone if |mean| >> std; switch to a
    # shifted / Welford accumulation if BN fidelity on such activations matters.
    var = jnp.maximum(sums[:Cout, 1] / cnt - mean * mean, 0.0)
    g32 = gamma.astype(jnp.float32)
    b32 = beta.astype(jnp.float32)
    inv = lax.rsqrt(var + BN_EPS)
    scale = (g32 * inv).reshape(Cout, 1)
    shift = (b32 - mean * g32 * inv).reshape(Cout, 1)

    # ---------------- kernel 2: BN apply + ReLU + strip padded-width junk columns --------------
    def bn_kernel(y_ref, sc_ref, sh_ref, o_ref):
        # y_ref: (1, 1, Cout, tlp) bf16 ; sc/sh: (Cout, 1) f32 ; o_ref: (1, Cout, th, Wout) f32
        yb = y_ref[0, 0].astype(jnp.float32)
        sc = sc_ref[...]
        sh = sh_ref[...]
        for r in range(th):                                # static unroll over output rows
            v = yb[:, r * Wp:r * Wp + Wout]
            o_ref[0, :, r, :] = jnp.maximum(v * sc + sh, 0.0)

    apply_cost = pl.CostEstimate(
        flops=3 * N * Cout * Hout * Wout,
        transcendentals=0,
        bytes_accessed=N * Cout * (Hout * Wp * 2 + Hout * Wout * 4) + 2 * Cout * 4)

    out = pl.pallas_call(
        bn_kernel,
        out_shape=jax.ShapeDtypeStruct((N, Cout, Hout, Wout), jnp.float32),
        grid_spec=pltpu.PrefetchScalarGridSpec(
            num_scalar_prefetch=0,
            grid=(N, n_hb),
            in_specs=[
                pl.BlockSpec((1, 1, Cout, tlp), lambda n, hb: (n, hb, 0, 0)),
                pl.BlockSpec((Cout, 1), lambda n, hb: (0, 0)),
                pl.BlockSpec((Cout, 1), lambda n, hb: (0, 0)),
            ],
            out_specs=pl.BlockSpec((1, Cout, th, Wout), lambda n, hb: (n, 0, hb, 0)),
        ),
        compiler_params=pltpu.CompilerParams(
            dimension_semantics=("parallel", "parallel"),
            vmem_limit_bytes=scoped_vmem),
        cost_estimate=apply_cost,
    )(y_t, scale, shift)

    # TODO(synk): BatchNorm2d's running_mean/running_var buffer updates (a training-time side
    # effect, not part of the returned tensor) are not emitted.
    return out


# ---------------------------------------------------------------------------
# Pure-JAX (f32) reference for validation.
# ---------------------------------------------------------------------------
def reference(x_nchw, conv_w, gamma, beta):
    y = lax.conv_general_dilated(
        x_nchw.astype(jnp.float32), conv_w.astype(jnp.float32),
        window_strides=(1, 1), padding=((1, 1), (1, 1)),
        dimension_numbers=("NCHW", "OIHW", "NCHW"))
    mean = jnp.mean(y, axis=(0, 2, 3), keepdims=True)
    var = jnp.mean((y - mean) ** 2, axis=(0, 2, 3), keepdims=True)
    norm = (y - mean) * lax.rsqrt(var + BN_EPS)
    norm = norm * gamma.reshape(1, -1, 1, 1) + beta.reshape(1, -1, 1, 1)
    return jnp.maximum(norm, 0.0)


if __name__ == "__main__":
    key = jax.random.PRNGKey(0)
    k_x, k_w, k_g, k_b = jax.random.split(key, 4)

    N, Cin, Cout, H, W, K = 2, 4, 8, 16, 16, 3

    x = jax.random.normal(k_x, (N, Cin, H, W), dtype=jnp.float32)
    fan_in = Cin * K * K
    conv_w = jax.random.normal(k_w, (Cout, Cin, K, K), dtype=jnp.float32) / jnp.sqrt(fan_in)
    gamma = 1.0 + 0.1 * jax.random.normal(k_g, (Cout,), dtype=jnp.float32)
    beta = 0.1 * jax.random.normal(k_b, (Cout,), dtype=jnp.float32)

    out = lightweight_conv2d(x, conv_w, gamma, beta, kernel_size=K, padding=1)
    out = jax.block_until_ready(out)

    ref = reference(x, conv_w, gamma, beta)
    assert out.shape == (N, Cout, H, W), out.shape
    # bf16 matmul operands + bf16 conv intermediate (f32 accumulation / f32 BN math)
    # -> loosened tolerance vs. the pure-f32 reference.
    err = float(jnp.max(jnp.abs(out - ref)))
    assert err < 7.5e-2, f"max abs err {err}"

    print("KERNEL_OK")
</pallas_src>

<mosaic_0001>
module attributes {stable_mosaic.version = 11 : i64} {
  func.func @conv_kernel(%arg0: i32, %arg1: i32, %arg2: memref<1x16x342xbf16, #tpu.memory_space<vmem>>, %arg3: memref<128x144xbf16, #tpu.memory_space<vmem>>, %arg4: memref<1x288xf32, #tpu.memory_space<vmem>>, %arg5: memref<1x1x8x288xbf16, #tpu.memory_space<vmem>>, %arg6: memref<1x1x128x2xf32, #tpu.memory_space<vmem>>, %arg7: memref<144x288xbf16, #tpu.memory_space<vmem>>) attributes {dimension_semantics = [#tpu.dimension_semantics<parallel>, #tpu.dimension_semantics<arbitrary>], iteration_bounds = array<i64: 2, 1>, scalar_prefetch = 0 : i64, scratch_operands = 1 : i64, tpu.core_type = #tpu.core_type<tc>, window_params = [{transform_indices = @transform_0, window_bounds = array<i64: 1, 16, 342>}, {pipeline_mode = #tpu.pipeline_mode<synchronous>, transform_indices = @transform_1, window_bounds = array<i64: 128, 144>}, {pipeline_mode = #tpu.pipeline_mode<synchronous>, transform_indices = @transform_2, window_bounds = array<i64: 1, 288>}, {transform_indices = @transform_3, window_bounds = array<i64: 1, 1, 8, 288>}, {transform_indices = @transform_4, window_bounds = array<i64: 1, 1, 128, 2>}]} {
    %c0 = arith.constant 0 : index
    %c0_0 = arith.constant 0 : index
    %c0_1 = arith.constant 0 : index
    %0 = vector.load %arg2[%c0, %c0_0, %c0_1] : memref<1x16x342xbf16, #tpu.memory_space<vmem>>, vector<1x16x288xbf16>
    %1 = vector.shape_cast %0 : vector<1x16x288xbf16> to vector<16x288xbf16>
    %c0_2 = arith.constant 0 : index
    %c0_3 = arith.constant 0 : index
    %2 = vector.load %arg7[%c0_2, %c0_3] : memref<144x288xbf16, #tpu.memory_space<vmem>>, vector<16x288xbf16>
    tpu.vector_store %arg7[%c0_2, %c0_3], %1 {strides = array<i32>} : memref<144x288xbf16, #tpu.memory_space<vmem>>, vector<16x288xbf16>,
    %c0_4 = arith.constant 0 : index
    %c0_5 = arith.constant 0 : index
    %c1 = arith.constant 1 : index
    %3 = vector.load %arg2[%c0_4, %c0_5, %c1] : memref<1x16x342xbf16, #tpu.memory_space<vmem>>, vector<1x16x288xbf16>
    %4 = vector.shape_cast %3 : vector<1x16x288xbf16> to vector<16x288xbf16>
    %c16 = arith.constant 16 : index
    %c0_6 = arith.constant 0 : index
    %5 = vector.load %arg7[%c16, %c0_6] : memref<144x288xbf16, #tpu.memory_space<vmem>>, vector<16x288xbf16>
    tpu.vector_store %arg7[%c16, %c0_6], %4 {strides = array<i32>} : memref<144x288xbf16, #tpu.memory_space<vmem>>, vector<16x288xbf16>,
    %c0_7 = arith.constant 0 : index
    %c0_8 = arith.constant 0 : index
    %c2 = arith.constant 2 : index
    %6 = vector.load %arg2[%c0_7, %c0_8, %c2] : memref<1x16x342xbf16, #tpu.memory_space<vmem>>, vector<1x16x288xbf16>
    %7 = vector.shape_cast %6 : vector<1x16x288xbf16> to vector<16x288xbf16>
    %c32 = arith.constant 32 : index
    %c0_9 = arith.constant 0 : index
    %8 = vector.load %arg7[%c32, %c0_9] : memref<144x288xbf16, #tpu.memory_space<vmem>>, vector<16x288xbf16>
    tpu.vector_store %arg7[%c32, %c0_9], %7 {strides = array<i32>} : memref<144x288xbf16, #tpu.memory_space<vmem>>, vector<16x288xbf16>,
    %c0_10 = arith.constant 0 : index
    %c0_11 = arith.constant 0 : index
    %c18 = arith.constant 18 : index
    %9 = vector.load %arg2[%c0_10, %c0_11, %c18] : memref<1x16x342xbf16, #tpu.memory_space<vmem>>, vector<1x16x288xbf16>
    %10 = vector.shape_cast %9 : vector<1x16x288xbf16> to vector<16x288xbf16>
    %c48 = arith.constant 48 : index
    %c0_12 = arith.constant 0 : index
    %11 = vector.load %arg7[%c48, %c0_12] : memref<144x288xbf16, #tpu.memory_space<vmem>>, vector<16x288xbf16>
    tpu.vector_store %arg7[%c48, %c0_12], %10 {strides = array<i32>} : memref<144x288xbf16, #tpu.memory_space<vmem>>, vector<16x288xbf16>,
    %c0_13 = arith.constant 0 : index
    %c0_14 = arith.constant 0 : index
    %c19 = arith.constant 19 : index
    %12 = vector.load %arg2[%c0_13, %c0_14, %c19] : memref<1x16x342xbf16, #tpu.memory_space<vmem>>, vector<1x16x288xbf16>
    %13 = vector.shape_cast %12 : vector<1x16x288xbf16> to vector<16x288xbf16>
    %c64 = arith.constant 64 : index
    %c0_15 = arith.constant 0 : index
    %14 = vector.load %arg7[%c64, %c0_15] : memref<144x288xbf16, #tpu.memory_space<vmem>>, vector<16x288xbf16>
    tpu.vector_store %arg7[%c64, %c0_15], %13 {strides = array<i32>} : memref<144x288xbf16, #tpu.memory_space<vmem>>, vector<16x288xbf16>,
    %c0_16 = arith.constant 0 : index
    %c0_17 = arith.constant 0 : index
    %c20 = arith.constant 20 : index
    %15 = vector.load %arg2[%c0_16, %c0_17, %c20] : memref<1x16x342xbf16, #tpu.memory_space<vmem>>, vector<1x16x288xbf16>
    %16 = vector.shape_cast %15 : vector<1x16x288xbf16> to vector<16x288xbf16>
    %c80 = arith.constant 80 : index
    %c0_18 = arith.constant 0 : index
    %17 = vector.load %arg7[%c80, %c0_18] : memref<144x288xbf16, #tpu.memory_space<vmem>>, vector<16x288xbf16>
    tpu.vector_store %arg7[%c80, %c0_18], %16 {strides = array<i32>} : memref<144x288xbf16, #tpu.memory_space<vmem>>, vector<16x288xbf16>,
    %c0_19 = arith.constant 0 : index
    %c0_20 = arith.constant 0 : index
    %c36 = arith.constant 36 : index
    %18 = vector.load %arg2[%c0_19, %c0_20, %c36] : memref<1x16x342xbf16, #tpu.memory_space<vmem>>, vector<1x16x288xbf16>
    %19 = vector.shape_cast %18 : vector<1x16x288xbf16> to vector<16x288xbf16>
    %c96 = arith.constant 96 : index
    %c0_21 = arith.constant 0 : index
    %20 = vector.load %arg7[%c96, %c0_21] : memref<144x288xbf16, #tpu.memory_space<vmem>>, vector<16x288xbf16>
    tpu.vector_store %arg7[%c96, %c0_21], %19 {strides = array<i32>} : memref<144x288xbf16, #tpu.memory_space<vmem>>, vector<16x288xbf16>,
    %c0_22 = arith.constant 0 : index
    %c0_23 = arith.constant 0 : index
    %c37 = arith.constant 37 : index
    %21 = vector.load %arg2[%c0_22, %c0_23, %c37] : memref<1x16x342xbf16, #tpu.memory_space<vmem>>, vector<1x16x288xbf16>
    %22 = vector.shape_cast %21 : vector<1x16x288xbf16> to vector<16x288xbf16>
    %c112 = arith.constant 112 : index
    %c0_24 = arith.constant 0 : index
    %23 = vector.load %arg7[%c112, %c0_24] : memref<144x288xbf16, #tpu.memory_space<vmem>>, vector<16x288xbf16>
    tpu.vector_store %arg7[%c112, %c0_24], %22 {strides = array<i32>} : memref<144x288xbf16, #tpu.memory_space<vmem>>, vector<16x288xbf16>,
    %c0_25 = arith.constant 0 : index
    %c0_26 = arith.constant 0 : index
    %c38 = arith.constant 38 : index
    %24 = vector.load %arg2[%c0_25, %c0_26, %c38] : memref<1x16x342xbf16, #tpu.memory_space<vmem>>, vector<1x16x288xbf16>
    %25 = vector.shape_cast %24 : vector<1x16x288xbf16> to vector<16x288xbf16>
    %c128 = arith.constant 128 : index
    %c0_27 = arith.constant 0 : index
    %26 = vector.load %arg7[%c128, %c0_27] : memref<144x288xbf16, #tpu.memory_space<vmem>>, vector<16x288xbf16>
    tpu.vector_store %arg7[%c128, %c0_27], %25 {strides = array<i32>} : memref<144x288xbf16, #tpu.memory_space<vmem>>, vector<16x288xbf16>,
    %c0_28 = arith.constant 0 : index
    %c0_29 = arith.constant 0 : index
    %27 = vector.load %arg3[%c0_28, %c0_29] : memref<128x144xbf16, #tpu.memory_space<vmem>>, vector<128x144xbf16>
    %c0_30 = arith.constant 0 : index
    %c0_31 = arith.constant 0 : index
    %28 = vector.load %arg7[%c0_30, %c0_31] : memref<144x288xbf16, #tpu.memory_space<vmem>>, vector<144x288xbf16>
    %cst = arith.constant dense<0.000000e+00> : vector<128x288xf32>
    %29 = tpu.matmul %27, %28, %cst {dimension_numbers = #tpu.dot_dimension_numbers<[1], [0], [0], [1], [0, 0, 1, 1], [], []>} : vector<128x144xbf16>, vector<144x288xbf16>, vector<128x288xf32> -> vector<128x288xf32>
    %c0_32 = arith.constant 0 : index
    %c0_33 = arith.constant 0 : index
    %30 = vector.load %arg4[%c0_32, %c0_33] : memref<1x288xf32, #tpu.memory_space<vmem>>, vector<1x288xf32>
    %31 = vector.broadcast %30 : vector<1x288xf32> to vector<128x288xf32>
    %32 = arith.mulf %29, %31 : vector<128x288xf32>
    %cst_34 = arith.constant dense<0.000000e+00> : vector<128xf32>
    %33 = vector.multi_reduction <add>, %32, %cst_34 [1] : vector<128x288xf32> to vector<128xf32>
    %34 = vector.shape_cast %33 : vector<128xf32> to vector<128x1xf32>
    %c0_35 = arith.constant 0 : index
    %c0_36 = arith.constant 0 : index
    %c0_37 = arith.constant 0 : index
    %c0_38 = arith.constant 0 : index
    %35 = vector.load %arg6[%c0_35, %c0_36, %c0_37, %c0_38] : memref<1x1x128x2xf32, #tpu.memory_space<vmem>>, vector<1x1x128x1xf32>
    %36 = vector.shape_cast %35 : vector<1x1x128x1xf32> to vector<128x1xf32>
    %37 = vector.shape_cast %34 : vector<128x1xf32> to vector<1x1x128x1xf32>
    tpu.vector_store %arg6[%c0_35, %c0_36, %c0_37, %c0_38], %37 {strides = array<i32>} : memref<1x1x128x2xf32, #tpu.memory_space<vmem>>, vector<1x1x128x1xf32>,
    %38 = arith.mulf %32, %32 : vector<128x288xf32>
    %cst_39 = arith.constant dense<0.000000e+00> : vector<128xf32>
    %39 = vector.multi_reduction <add>, %38, %cst_39 [1] : vector<128x288xf32> to vector<128xf32>
    %40 = vector.shape_cast %39 : vector<128xf32> to vector<128x1xf32>
    %c0_40 = arith.constant 0 : index
    %c0_41 = arith.constant 0 : index
    %c0_42 = arith.constant 0 : index
    %c1_43 = arith.constant 1 : index
    %41 = vector.load %arg6[%c0_40, %c0_41, %c0_42, %c1_43] : memref<1x1x128x2xf32, #tpu.memory_space<vmem>>, vector<1x1x128x1xf32>
    %42 = vector.shape_cast %41 : vector<1x1x128x1xf32> to vector<128x1xf32>
    %43 = vector.shape_cast %40 : vector<128x1xf32> to vector<1x1x128x1xf32>
    tpu.vector_store %arg6[%c0_40, %c0_41, %c0_42, %c1_43], %43 {strides = array<i32>} : memref<1x1x128x2xf32, #tpu.memory_space<vmem>>, vector<1x1x128x1xf32>,
    %44 = vector.extract_strided_slice %29 {offsets = [0, 0], sizes = [8, 288], strides = [1, 1]} : vector<128x288xf32> to vector<8x288xf32>
    %45 = arith.truncf %44 : vector<8x288xf32> to vector<8x288xbf16>
    %c0_44 = arith.constant 0 : index
    %c0_45 = arith.constant 0 : index
    %c0_46 = arith.constant 0 : index
    %c0_47 = arith.constant 0 : index
    %46 = vector.load %arg5[%c0_44, %c0_45, %c0_46, %c0_47] : memref<1x1x8x288xbf16, #tpu.memory_space<vmem>>, vector<1x1x8x288xbf16>
    %47 = vector.shape_cast %46 : vector<1x1x8x288xbf16> to vector<8x288xbf16>
    %48 = vector.shape_cast %45 : vector<8x288xbf16> to vector<1x1x8x288xbf16>
    tpu.vector_store %arg5[%c0_44, %c0_45, %c0_46, %c0_47], %48 {strides = array<i32>} : memref<1x1x8x288xbf16, #tpu.memory_space<vmem>>, vector<1x1x8x288xbf16>,
    return
  }
  func.func @transform_0(%arg0: i32, %arg1: i32) -> (i32, i32, i32) {
    %c0_i32 = arith.constant 0 : i32
    %c0_i32_0 = arith.constant 0 : i32
    %c0_i32_1 = arith.constant 0 : i32
    return %arg0, %c0_i32, %c0_i32_0 : i32, i32, i32
  }
  func.func @transform_1(%arg0: i32, %arg1: i32) -> (i32, i32) {
    %c0_i32 = arith.constant 0 : i32
    %c0_i32_0 = arith.constant 0 : i32
    %c0_i32_1 = arith.constant 0 : i32
    return %c0_i32, %c0_i32_0 : i32, i32
  }
  func.func @transform_2(%arg0: i32, %arg1: i32) -> (i32, i32) {
    %c0_i32 = arith.constant 0 : i32
    %c0_i32_0 = arith.constant 0 : i32
    %c0_i32_1 = arith.constant 0 : i32
    return %c0_i32, %c0_i32_0 : i32, i32
  }
  func.func @transform_3(%arg0: i32, %arg1: i32) -> (i32, i32, i32, i32) {
    %c0_i32 = arith.constant 0 : i32
    %c0_i32_0 = arith.constant 0 : i32
    %c0_i32_1 = arith.constant 0 : i32
    return %arg0, %arg1, %c0_i32, %c0_i32_0 : i32, i32, i32, i32
  }
  func.func @transform_4(%arg0: i32, %arg1: i32) -> (i32, i32, i32, i32) {
    %c0_i32 = arith.constant 0 : i32
    %c0_i32_0 = arith.constant 0 : i32
    %c0_i32_1 = arith.constant 0 : i32
    return %arg0, %arg1, %c0_i32, %c0_i32_0 : i32, i32, i32, i32
  }
}

module attributes {stable_mosaic.version = 11 : i64} {
  func.func @bn_kernel(%arg0: i32, %arg1: i32, %arg2: memref<1x1x8x288xbf16, #tpu.memory_space<vmem>>, %arg3: memref<8x1xf32, #tpu.memory_space<vmem>>, %arg4: memref<8x1xf32, #tpu.memory_space<vmem>>, %arg5: memref<1x8x16x16xf32, #tpu.memory_space<vmem>>) attributes {dimension_semantics = [#tpu.dimension_semantics<parallel>, #tpu.dimension_semantics<parallel>], iteration_bounds = array<i64: 2, 1>, scalar_prefetch = 0 : i64, scratch_operands = 0 : i64, tpu.core_type = #tpu.core_type<tc>, window_params = [{transform_indices = @transform_0, window_bounds = array<i64: 1, 1, 8, 288>}, {pipeline_mode = #tpu.pipeline_mode<synchronous>, transform_indices = @transform_1, window_bounds = array<i64: 8, 1>}, {pipeline_mode = #tpu.pipeline_mode<synchronous>, transform_indices = @transform_2, window_bounds = array<i64: 8, 1>}, {transform_indices = @transform_3, window_bounds = array<i64: 1, 8, 16, 16>}]} {
    %c0 = arith.constant 0 : index
    %c0_0 = arith.constant 0 : index
    %c0_1 = arith.constant 0 : index
    %c0_2 = arith.constant 0 : index
    %0 = vector.load %arg2[%c0, %c0_0, %c0_1, %c0_2] : memref<1x1x8x288xbf16, #tpu.memory_space<vmem>>, vector<1x1x8x288xbf16>
    %1 = vector.shape_cast %0 : vector<1x1x8x288xbf16> to vector<8x288xbf16>
    %2 = arith.extf %1 : vector<8x288xbf16> to vector<8x288xf32>
    %c0_3 = arith.constant 0 : index
    %c0_4 = arith.constant 0 : index
    %3 = vector.load %arg3[%c0_3, %c0_4] : memref<8x1xf32, #tpu.memory_space<vmem>>, vector<8x1xf32>
    %c0_5 = arith.constant 0 : index
    %c0_6 = arith.constant 0 : index
    %4 = vector.load %arg4[%c0_5, %c0_6] : memref<8x1xf32, #tpu.memory_space<vmem>>, vector<8x1xf32>
    %5 = vector.extract_strided_slice %2 {offsets = [0, 0], sizes = [8, 16], strides = [1, 1]} : vector<8x288xf32> to vector<8x16xf32>
    %6 = vector.broadcast %3 : vector<8x1xf32> to vector<8x16xf32>
    %7 = arith.mulf %5, %6 : vector<8x16xf32>
    %8 = vector.broadcast %4 : vector<8x1xf32> to vector<8x16xf32>
    %9 = arith.addf %7, %8 : vector<8x16xf32>
    %cst = arith.constant 0.000000e+00 : f32
    %10 = vector.broadcast %cst : f32 to vector<8x16xf32>
    %11 = arith.maximumf %9, %10 : vector<8x16xf32>
    %c0_7 = arith.constant 0 : index
    %c0_8 = arith.constant 0 : index
    %c0_9 = arith.constant 0 : index
    %c0_10 = arith.constant 0 : index
    %12 = vector.load %arg5[%c0_7, %c0_8, %c0_9, %c0_10] : memref<1x8x16x16xf32, #tpu.memory_space<vmem>>, vector<1x8x1x16xf32>
    %13 = vector.shape_cast %12 : vector<1x8x1x16xf32> to vector<8x16xf32>
    %14 = vector.shape_cast %11 : vector<8x16xf32> to vector<1x8x1x16xf32>
    tpu.vector_store %arg5[%c0_7, %c0_8, %c0_9, %c0_10], %14 {strides = array<i32>} : memref<1x8x16x16xf32, #tpu.memory_space<vmem>>, vector<1x8x1x16xf32>,
    %15 = vector.extract_strided_slice %2 {offsets = [0, 18], sizes = [8, 16], strides = [1, 1]} : vector<8x288xf32> to vector<8x16xf32>
    %16 = vector.broadcast %3 : vector<8x1xf32> to vector<8x16xf32>
    %17 = arith.mulf %15, %16 : vector<8x16xf32>
    %18 = vector.broadcast %4 : vector<8x1xf32> to vector<8x16xf32>
    %19 = arith.addf %17, %18 : vector<8x16xf32>
    %cst_11 = arith.constant 0.000000e+00 : f32
    %20 = vector.broadcast %cst_11 : f32 to vector<8x16xf32>
    %21 = arith.maximumf %19, %20 : vector<8x16xf32>
    %c0_12 = arith.constant 0 : index
    %c0_13 = arith.constant 0 : index
    %c1 = arith.constant 1 : index
    %c0_14 = arith.constant 0 : index
    %22 = vector.load %arg5[%c0_12, %c0_13, %c1, %c0_14] : memref<1x8x16x16xf32, #tpu.memory_space<vmem>>, vector<1x8x1x16xf32>
    %23 = vector.shape_cast %22 : vector<1x8x1x16xf32> to vector<8x16xf32>
    %24 = vector.shape_cast %21 : vector<8x16xf32> to vector<1x8x1x16xf32>
    tpu.vector_store %arg5[%c0_12, %c0_13, %c1, %c0_14], %24 {strides = array<i32>} : memref<1x8x16x16xf32, #tpu.memory_space<vmem>>, vector<1x8x1x16xf32>,
    %25 = vector.extract_strided_slice %2 {offsets = [0, 36], sizes = [8, 16], strides = [1, 1]} : vector<8x288xf32> to vector<8x16xf32>
    %26 = vector.broadcast %3 : vector<8x1xf32> to vector<8x16xf32>
    %27 = arith.mulf %25, %26 : vector<8x16xf32>
    %28 = vector.broadcast %4 : vector<8x1xf32> to vector<8x16xf32>
    %29 = arith.addf %27, %28 : vector<8x16xf32>
    %cst_15 = arith.constant 0.000000e+00 : f32
    %30 = vector.broadcast %cst_15 : f32 to vector<8x16xf32>
    %31 = arith.maximumf %29, %30 : vector<8x16xf32>
    %c0_16 = arith.constant 0 : index
    %c0_17 = arith.constant 0 : index
    %c2 = arith.constant 2 : index
    %c0_18 = arith.constant 0 : index
    %32 = vector.load %arg5[%c0_16, %c0_17, %c2, %c0_18] : memref<1x8x16x16xf32, #tpu.memory_space<vmem>>, vector<1x8x1x16xf32>
    %33 = vector.shape_cast %32 : vector<1x8x1x16xf32> to vector<8x16xf32>
    %34 = vector.shape_cast %31 : vector<8x16xf32> to vector<1x8x1x16xf32>
    tpu.vector_store %arg5[%c0_16, %c0_17, %c2, %c0_18], %34 {strides = array<i32>} : memref<1x8x16x16xf32, #tpu.memory_space<vmem>>, vector<1x8x1x16xf32>,
    %35 = vector.extract_strided_slice %2 {offsets = [0, 54], sizes = [8, 16], strides = [1, 1]} : vector<8x288xf32> to vector<8x16xf32>
    %36 = vector.broadcast %3 : vector<8x1xf32> to vector<8x16xf32>
    %37 = arith.mulf %35, %36 : vector<8x16xf32>
    %38 = vector.broadcast %4 : vector<8x1xf32> to vector<8x16xf32>
    %39 = arith.addf %37, %38 : vector<8x16xf32>
    %cst_19 = arith.constant 0.000000e+00 : f32
    %40 = vector.broadcast %cst_19 : f32 to vector<8x16xf32>
    %41 = arith.maximumf %39, %40 : vector<8x16xf32>
    %c0_20 = arith.constant 0 : index
    %c0_21 = arith.constant 0 : index
    %c3 = arith.constant 3 : index
    %c0_22 = arith.constant 0 : index
    %42 = vector.load %arg5[%c0_20, %c0_21, %c3, %c0_22] : memref<1x8x16x16xf32, #tpu.memory_space<vmem>>, vector<1x8x1x16xf32>
    %43 = vector.shape_cast %42 : vector<1x8x1x16xf32> to vector<8x16xf32>
    %44 = vector.shape_cast %41 : vector<8x16xf32> to vector<1x8x1x16xf32>
    tpu.vector_store %arg5[%c0_20, %c0_21, %c3, %c0_22], %44 {strides = array<i32>} : memref<1x8x16x16xf32, #tpu.memory_space<vmem>>, vector<1x8x1x16xf32>,
    %45 = vector.extract_strided_slice %2 {offsets = [0, 72], sizes = [8, 16], strides = [1, 1]} : vector<8x288xf32> to vector<8x16xf32>
    %46 = vector.broadcast %3 : vector<8x1xf32> to vector<8x16xf32>
    %47 = arith.mulf %45, %46 : vector<8x16xf32>
    %48 = vector.broadcast %4 : vector<8x1xf32> to vector<8x16xf32>
    %49 = arith.addf %47, %48 : vector<8x16xf32>
    %cst_23 = arith.constant 0.000000e+00 : f32
    %50 = vector.broadcast %cst_23 : f32 to vector<8x16xf32>
    %51 = arith.maximumf %49, %50 : vector<8x16xf32>
    %c0_24 = arith.constant 0 : index
    %c0_25 = arith.constant 0 : index
    %c4 = arith.constant 4 : index
    %c0_26 = arith.constant 0 : index
    %52 = vector.load %arg5[%c0_24, %c0_25, %c4, %c0_26] : memref<1x8x16x16xf32, #tpu.memory_space<vmem>>, vector<1x8x1x16xf32>
    %53 = vector.shape_cast %52 : vector<1x8x1x16xf32> to vector<8x16xf32>
    %54 = vector.shape_cast %51 : vector<8x16xf32> to vector<1x8x1x16xf32>
    tpu.vector_store %arg5[%c0_24, %c0_25, %c4, %c0_26], %54 {strides = array<i32>} : memref<1x8x16x16xf32, #tpu.memory_space<vmem>>, vector<1x8x1x16xf32>,
    %55 = vector.extract_strided_slice %2 {offsets = [0, 90], sizes = [8, 16], strides = [1, 1]} : vector<8x288xf32> to vector<8x16xf32>
    %56 = vector.broadcast %3 : vector<8x1xf32> to vector<8x16xf32>
    %57 = arith.mulf %55, %56 : vector<8x16xf32>
    %58 = vector.broadcast %4 : vector<8x1xf32> to vector<8x16xf32>
    %59 = arith.addf %57, %58 : vector<8x16xf32>
    %cst_27 = arith.constant 0.000000e+00 : f32
    %60 = vector.broadcast %cst_27 : f32 to vector<8x16xf32>
    %61 = arith.maximumf %59, %60 : vector<8x16xf32>
    %c0_28 = arith.constant 0 : index
    %c0_29 = arith.constant 0 : index
    %c5 = arith.constant 5 : index
    %c0_30 = arith.constant 0 : index
    %62 = vector.load %arg5[%c0_28, %c0_29, %c5, %c0_30] : memref<1x8x16x16xf32, #tpu.memory_space<vmem>>, vector<1x8x1x16xf32>
    %63 = vector.shape_cast %62 : vector<1x8x1x16xf32> to vector<8x16xf32>
    %64 = vector.shape_cast %61 : vector<8x16xf32> to vector<1x8x1x16xf32>
    tpu.vector_store %arg5[%c0_28, %c0_29, %c5, %c0_30], %64 {strides = array<i32>} : memref<1x8x16x16xf32, #tpu.memory_space<vmem>>, vector<1x8x1x16xf32>,
    %65 = vector.extract_strided_slice %2 {offsets = [0, 108], sizes = [8, 16], strides = [1, 1]} : vector<8x288xf32> to vector<8x16xf32>
    %66 = vector.broadcast %3 : vector<8x1xf32> to vector<8x16xf32>
    %67 = arith.mulf %65, %66 : vector<8x16xf32>
    %68 = vector.broadcast %4 : vector<8x1xf32> to vector<8x16xf32>
    %69 = arith.addf %67, %68 : vector<8x16xf32>
    %cst_31 = arith.constant 0.000000e+00 : f32
    %70 = vector.broadcast %cst_31 : f32 to vector<8x16xf32>
    %71 = arith.maximumf %69, %70 : vector<8x16xf32>
    %c0_32 = arith.constant 0 : index
    %c0_33 = arith.constant 0 : index
    %c6 = arith.constant 6 : index
    %c0_34 = arith.constant 0 : index
    %72 = vector.load %arg5[%c0_32, %c0_33, %c6, %c0_34] : memref<1x8x16x16xf32, #tpu.memory_space<vmem>>, vector<1x8x1x16xf32>
    %73 = vector.shape_cast %72 : vector<1x8x1x16xf32> to vector<8x16xf32>
    %74 = vector.shape_cast %71 : vector<8x16xf32> to vector<1x8x1x16xf32>
    tpu.vector_store %arg5[%c0_32, %c0_33, %c6, %c0_34], %74 {strides = array<i32>} : memref<1x8x16x16xf32, #tpu.memory_space<vmem>>, vector<1x8x1x16xf32>,
    %75 = vector.extract_strided_slice %2 {offsets = [0, 126], sizes = [8, 16], strides = [1, 1]} : vector<8x288xf32> to vector<8x16xf32>
    %76 = vector.broadcast %3 : vector<8x1xf32> to vector<8x16xf32>
    %77 = arith.mulf %75, %76 : vector<8x16xf32>
    %78 = vector.broadcast %4 : vector<8x1xf32> to vector<8x16xf32>
    %79 = arith.addf %77, %78 : vector<8x16xf32>
    %cst_35 = arith.constant 0.000000e+00 : f32
    %80 = vector.broadcast %cst_35 : f32 to vector<8x16xf32>
    %81 = arith.maximumf %79, %80 : vector<8x16xf32>
    %c0_36 = arith.constant 0 : index
    %c0_37 = arith.constant 0 : index
    %c7 = arith.constant 7 : index
    %c0_38 = arith.constant 0 : index
    %82 = vector.load %arg5[%c0_36, %c0_37, %c7, %c0_38] : memref<1x8x16x16xf32, #tpu.memory_space<vmem>>, vector<1x8x1x16xf32>
    %83 = vector.shape_cast %82 : vector<1x8x1x16xf32> to vector<8x16xf32>
    %84 = vector.shape_cast %81 : vector<8x16xf32> to vector<1x8x1x16xf32>
    tpu.vector_store %arg5[%c0_36, %c0_37, %c7, %c0_38], %84 {strides = array<i32>} : memref<1x8x16x16xf32, #tpu.memory_space<vmem>>, vector<1x8x1x16xf32>,
    %85 = vector.extract_strided_slice %2 {offsets = [0, 144], sizes = [8, 16], strides = [1, 1]} : vector<8x288xf32> to vector<8x16xf32>
    %86 = vector.broadcast %3 : vector<8x1xf32> to vector<8x16xf32>
    %87 = arith.mulf %85, %86 : vector<8x16xf32>
    %88 = vector.broadcast %4 : vector<8x1xf32> to vector<8x16xf32>
    %89 = arith.addf %87, %88 : vector<8x16xf32>
    %cst_39 = arith.constant 0.000000e+00 : f32
    %90 = vector.broadcast %cst_39 : f32 to vector<8x16xf32>
    %91 = arith.maximumf %89, %90 : vector<8x16xf32>
    %c0_40 = arith.constant 0 : index
    %c0_41 = arith.constant 0 : index
    %c8 = arith.constant 8 : index
    %c0_42 = arith.constant 0 : index
    %92 = vector.load %arg5[%c0_40, %c0_41, %c8, %c0_42] : memref<1x8x16x16xf32, #tpu.memory_space<vmem>>, vector<1x8x1x16xf32>
    %93 = vector.shape_cast %92 : vector<1x8x1x16xf32> to vector<8x16xf32>
    %94 = vector.shape_cast %91 : vector<8x16xf32> to vector<1x8x1x16xf32>
    tpu.vector_store %arg5[%c0_40, %c0_41, %c8, %c0_42], %94 {strides = array<i32>} : memref<1x8x16x16xf32, #tpu.memory_space<vmem>>, vector<1x8x1x16xf32>,
    %95 = vector.extract_strided_slice %2 {offsets = [0, 162], sizes = [8, 16], strides = [1, 1]} : vector<8x288xf32> to vector<8x16xf32>
    %96 = vector.broadcast %3 : vector<8x1xf32> to vector<8x16xf32>
    %97 = arith.mulf %95, %96 : vector<8x16xf32>
    %98 = vector.broadcast %4 : vector<8x1xf32> to vector<8x16xf32>
    %99 = arith.addf %97, %98 : vector<8x16xf32>
    %cst_43 = arith.constant 0.000000e+00 : f32
    %100 = vector.broadcast %cst_43 : f32 to vector<8x16xf32>
    %101 = arith.maximumf %99, %100 : vector<8x16xf32>
    %c0_44 = arith.constant 0 : index
    %c0_45 = arith.constant 0 : index
    %c9 = arith.constant 9 : index
    %c0_46 = arith.constant 0 : index
    %102 = vector.load %arg5[%c0_44, %c0_45, %c9, %c0_46] : memref<1x8x16x16xf32, #tpu.memory_space<vmem>>, vector<1x8x1x16xf32>
    %103 = vector.shape_cast %102 : vector<1x8x1x16xf32> to vector<8x16xf32>
    %104 = vector.shape_cast %101 : vector<8x16xf32> to vector<1x8x1x16xf32>
    tpu.vector_store %arg5[%c0_44, %c0_45, %c9, %c0_46], %104 {strides = array<i32>} : memref<1x8x16x16xf32, #tpu.memory_space<vmem>>, vector<1x8x1x16xf32>,
    %105 = vector.extract_strided_slice %2 {offsets = [0, 180], sizes = [8, 16], strides = [1, 1]} : vector<8x288xf32> to vector<8x16xf32>
    %106 = vector.broadcast %3 : vector<8x1xf32> to vector<8x16xf32>
    %107 = arith.mulf %105, %106 : vector<8x16xf32>
    %108 = vector.broadcast %4 : vector<8x1xf32> to vector<8x16xf32>
    %109 = arith.addf %107, %108 : vector<8x16xf32>
    %cst_47 = arith.constant 0.000000e+00 : f32
    %110 = vector.broadcast %cst_47 : f32 to vector<8x16xf32>
    %111 = arith.maximumf %109, %110 : vector<8x16xf32>
    %c0_48 = arith.constant 0 : index
    %c0_49 = arith.constant 0 : index
    %c10 = arith.constant 10 : index
    %c0_50 = arith.constant 0 : index
    %112 = vector.load %arg5[%c0_48, %c0_49, %c10, %c0_50] : memref<1x8x16x16xf32, #tpu.memory_space<vmem>>, vector<1x8x1x16xf32>
    %113 = vector.shape_cast %112 : vector<1x8x1x16xf32> to vector<8x16xf32>
    %114 = vector.shape_cast %111 : vector<8x16xf32> to vector<1x8x1x16xf32>
    tpu.vector_store %arg5[%c0_48, %c0_49, %c10, %c0_50], %114 {strides = array<i32>} : memref<1x8x16x16xf32, #tpu.memory_space<vmem>>, vector<1x8x1x16xf32>,
    %115 = vector.extract_strided_slice %2 {offsets = [0, 198], sizes = [8, 16], strides = [1, 1]} : vector<8x288xf32> to vector<8x16xf32>
    %116 = vector.broadcast %3 : vector<8x1xf32> to vector<8x16xf32>
    %117 = arith.mulf %115, %116 : vector<8x16xf32>
    %118 = vector.broadcast %4 : vector<8x1xf32> to vector<8x16xf32>
    %119 = arith.addf %117, %118 : vector<8x16xf32>
    %cst_51 = arith.constant 0.000000e+00 : f32
    %120 = vector.broadcast %cst_51 : f32 to vector<8x16xf32>
    %121 = arith.maximumf %119, %120 : vector<8x16xf32>
    %c0_52 = arith.constant 0 : index
    %c0_53 = arith.constant 0 : index
    %c11 = arith.constant 11 : index
    %c0_54 = arith.constant 0 : index
    %122 = vector.load %arg5[%c0_52, %c0_53, %c11, %c0_54] : memref<1x8x16x16xf32, #tpu.memory_space<vmem>>, vector<1x8x1x16xf32>
    %123 = vector.shape_cast %122 : vector<1x8x1x16xf32> to vector<8x16xf32>
    %124 = vector.shape_cast %121 : vector<8x16xf32> to vector<1x8x1x16xf32>
    tpu.vector_store %arg5[%c0_52, %c0_53, %c11, %c0_54], %124 {strides = array<i32>} : memref<1x8x16x16xf32, #tpu.memory_space<vmem>>, vector<1x8x1x16xf32>,
    %125 = vector.extract_strided_slice %2 {offsets = [0, 216], sizes = [8, 16], strides = [1, 1]} : vector<8x288xf32> to vector<8x16xf32>
    %126 = vector.broadcast %3 : vector<8x1xf32> to vector<8x16xf32>
    %127 = arith.mulf %125, %126 : vector<8x16xf32>
    %128 = vector.broadcast %4 : vector<8x1xf32> to vector<8x16xf32>
    %129 = arith.addf %127, %128 : vector<8x16xf32>
    %cst_55 = arith.constant 0.000000e+00 : f32
    %130 = vector.broadcast %cst_55 : f32 to vector<8x16xf32>
    %131 = arith.maximumf %129, %130 : vector<8x16xf32>
    %c0_56 = arith.constant 0 : index
    %c0_57 = arith.constant 0 : index
    %c12 = arith.constant 12 : index
    %c0_58 = arith.constant 0 : index
    %132 = vector.load %arg5[%c0_56, %c0_57, %c12, %c0_58] : memref<1x8x16x16xf32, #tpu.memory_space<vmem>>, vector<1x8x1x16xf32>
    %133 = vector.shape_cast %132 : vector<1x8x1x16xf32> to vector<8x16xf32>
    %134 = vector.shape_cast %131 : vector<8x16xf32> to vector<1x8x1x16xf32>
    tpu.vector_store %arg5[%c0_56, %c0_57, %c12, %c0_58], %134 {strides = array<i32>} : memref<1x8x16x16xf32, #tpu.memory_space<vmem>>, vector<1x8x1x16xf32>,
    %135 = vector.extract_strided_slice %2 {offsets = [0, 234], sizes = [8, 16], strides = [1, 1]} : vector<8x288xf32> to vector<8x16xf32>
    %136 = vector.broadcast %3 : vector<8x1xf32> to vector<8x16xf32>
    %137 = arith.mulf %135, %136 : vector<8x16xf32>
    %138 = vector.broadcast %4 : vector<8x1xf32> to vector<8x16xf32>
    %139 = arith.addf %137, %138 : vector<8x16xf32>
    %cst_59 = arith.constant 0.000000e+00 : f32
    %140 = vector.broadcast %cst_59 : f32 to vector<8x16xf32>
    %141 = arith.maximumf %139, %140 : vector<8x16xf32>
    %c0_60 = arith.constant 0 : index
    %c0_61 = arith.constant 0 : index
    %c13 = arith.constant 13 : index
    %c0_62 = arith.constant 0 : index
    %142 = vector.load %arg5[%c0_60, %c0_61, %c13, %c0_62] : memref<1x8x16x16xf32, #tpu.memory_space<vmem>>, vector<1x8x1x16xf32>
    %143 = vector.shape_cast %142 : vector<1x8x1x16xf32> to vector<8x16xf32>
    %144 = vector.shape_cast %141 : vector<8x16xf32> to vector<1x8x1x16xf32>
    tpu.vector_store %arg5[%c0_60, %c0_61, %c13, %c0_62], %144 {strides = array<i32>} : memref<1x8x16x16xf32, #tpu.memory_space<vmem>>, vector<1x8x1x16xf32>,
    %145 = vector.extract_strided_slice %2 {offsets = [0, 252], sizes = [8, 16], strides = [1, 1]} : vector<8x288xf32> to vector<8x16xf32>
    %146 = vector.broadcast %3 : vector<8x1xf32> to vector<8x16xf32>
    %147 = arith.mulf %145, %146 : vector<8x16xf32>
    %148 = vector.broadcast %4 : vector<8x1xf32> to vector<8x16xf32>
    %149 = arith.addf %147, %148 : vector<8x16xf32>
    %cst_63 = arith.constant 0.000000e+00 : f32
    %150 = vector.broadcast %cst_63 : f32 to vector<8x16xf32>
    %151 = arith.maximumf %149, %150 : vector<8x16xf32>
    %c0_64 = arith.constant 0 : index
    %c0_65 = arith.constant 0 : index
    %c14 = arith.constant 14 : index
    %c0_66 = arith.constant 0 : index
    %152 = vector.load %arg5[%c0_64, %c0_65, %c14, %c0_66] : memref<1x8x16x16xf32, #tpu.memory_space<vmem>>, vector<1x8x1x16xf32>
    %153 = vector.shape_cast %152 : vector<1x8x1x16xf32> to vector<8x16xf32>
    %154 = vector.shape_cast %151 : vector<8x16xf32> to vector<1x8x1x16xf32>
    tpu.vector_store %arg5[%c0_64, %c0_65, %c14, %c0_66], %154 {strides = array<i32>} : memref<1x8x16x16xf32, #tpu.memory_space<vmem>>, vector<1x8x1x16xf32>,
    %155 = vector.extract_strided_slice %2 {offsets = [0, 270], sizes = [8, 16], strides = [1, 1]} : vector<8x288xf32> to vector<8x16xf32>
    %156 = vector.broadcast %3 : vector<8x1xf32> to vector<8x16xf32>
    %157 = arith.mulf %155, %156 : vector<8x16xf32>
    %158 = vector.broadcast %4 : vector<8x1xf32> to vector<8x16xf32>
    %159 = arith.addf %157, %158 : vector<8x16xf32>
    %cst_67 = arith.constant 0.000000e+00 : f32
    %160 = vector.broadcast %cst_67 : f32 to vector<8x16xf32>
    %161 = arith.maximumf %159, %160 : vector<8x16xf32>
    %c0_68 = arith.constant 0 : index
    %c0_69 = arith.constant 0 : index
    %c15 = arith.constant 15 : index
    %c0_70 = arith.constant 0 : index
    %162 = vector.load %arg5[%c0_68, %c0_69, %c15, %c0_70] : memref<1x8x16x16xf32, #tpu.memory_space<vmem>>, vector<1x8x1x16xf32>
    %163 = vector.shape_cast %162 : vector<1x8x1x16xf32> to vector<8x16xf32>
    %164 = vector.shape_cast %161 : vector<8x16xf32> to vector<1x8x1x16xf32>
    tpu.vector_store %arg5[%c0_68, %c0_69, %c15, %c0_70], %164 {strides = array<i32>} : memref<1x8x16x16xf32, #tpu.memory_space<vmem>>, vector<1x8x1x16xf32>,
    return
  }
  func.func @transform_0(%arg0: i32, %arg1: i32) -> (i32, i32, i32, i32) {
    %c0_i32 = arith.constant 0 : i32
    %c0_i32_0 = arith.constant 0 : i32
    %c0_i32_1 = arith.constant 0 : i32
    return %arg0, %arg1, %c0_i32, %c0_i32_0 : i32, i32, i32, i32
  }
  func.func @transform_1(%arg0: i32, %arg1: i32) -> (i32, i32) {
    %c0_i32 = arith.constant 0 : i32
    %c0_i32_0 = arith.constant 0 : i32
    %c0_i32_1 = arith.constant 0 : i32
    return %c0_i32, %c0_i32_0 : i32, i32
  }
  func.func @transform_2(%arg0: i32, %arg1: i32) -> (i32, i32) {
    %c0_i32 = arith.constant 0 : i32
    %c0_i32_0 = arith.constant 0 : i32
    %c0_i32_1 = arith.constant 0 : i32
    return %c0_i32, %c0_i32_0 : i32, i32
  }
  func.func @transform_3(%arg0: i32, %arg1: i32) -> (i32, i32, i32, i32) {
    %c0_i32 = arith.constant 0 : i32
    %c0_i32_0 = arith.constant 0 : i32
    %c0_i32_1 = arith.constant 0 : i32
    return %arg0, %c0_i32, %arg1, %c0_i32_0 : i32, i32, i32, i32
  }
}

</mosaic_0001>

<llo_original>
// kernel: lightweight_conv2d.3
$region0: #{lightweight_conv2d.3}
  #allocation0 [shape = 'u32[]', space=smem, size = 0x4, offset = 0x4, fixed_abs, tag = 'smem constant byte address 0x4 - core index']
  #allocation1 [shape = 'u32[144,128]{1,0:T(1,128)}', space=vmem, size = 0x12000, scoped, tag = 'internal scratch']
  %s0 = inlined_call_operand.vmem [shape: bf16[2,1,8,288], index: 0, kind: input, shape index: {}]
  %s1 = inlined_call_operand.vmem [shape: f32[8,1], index: 1, kind: input, shape index: {}]
  %s2 = inlined_call_operand.vmem [shape: f32[8,1], index: 2, kind: input, shape index: {}]
  %s3 = inlined_call_operand.hbm [shape: f32[2,8,16,16], index: 3, kind: output, shape index: {}]
  %s4 = sld [smem:[#allocation0]]
  $region45: #{lightweight_conv2d.3} parent=0
    _
  %s6 = ssub.s32 1, %s4
  %s7 = scalar_select 0, %s6, %s4
  $region1: #{lightweight_conv2d.3} parent=0
    #allocation2 [shape = 'u8[131072]{0}', space=vmem, size = 0x20000, scoped, tag = 'output window, operand 0']
    #allocation3 [shape = 's32[2]{0}', space=sflag, size = 0x8, scoped, tag = 'scoped memory for lightweight_conv2d.3']
    %8 = vsyncpa [#allocation3], 0
    %s9 = scalar_lea.sflag [#allocation3], 1
    %10 = vsyncpa %s9, 0
    loop: start=0, step=1, limit=4
    $region2: #{lightweight_conv2d.3} parent=1 // loop_pre_header
      _
    $region3: #{lightweight_conv2d.3} parent=1 // loop_header
      %s12 = sphi 0, %s16
      %p13 = scmp.ge.s32.totalorder %s12, 4
      %s19 = sphi 0, %s31
      %s20 = sphi 0, %s27
      %s21 = sphi 0, %s19
      %s22 = sphi 0, %s20
      %s23 = sphi 0, %s21
      %s24 = sphi 0, %s22
      %s36 = sphi 0, %s38
      %s39 = sphi 0, %s36
      %s40 = sphi 0, %s39
      %s56 = sphi 0, %s40
      %s60 = sphi 0, %s60
      %s62 = sphi 0, %s60
      %s63 = sphi 0, %s62
      %s77 = sphi 0, %s63
      %s81 = sphi 0, %s81
      %s83 = sphi 0, %s81
      %s84 = sphi 0, %s83
      %s98 = sphi 0, %s84
      %s106 = sphi 0, %s108
      %s109 = sphi 0, %s106
      %s110 = sphi 0, %s109
      %s126 = sphi 0, %s110
    $region4: #{lightweight_conv2d.3} parent=1 // loop_header_branch
      %15 = sbr.rel (%p13) target = $region8
    $region5: #{lightweight_conv2d.3} parent=1 // loop_body
      %s17 = ssub.s32 %s12, 1
      %s18 = ssub.s32 %s12, 2
      %s25 = sadd.s32 1, %s20
      %p26 = scmp.ge.s32.totalorder %s25, 1
      %s27 = scalar_select %p26, 0, %s25
      %s28 = sadd.s32 1, %s19
      %s29 = scalar_select %p26, %s28, %s19
      %p30 = scmp.ge.s32.totalorder %s29, 2
      %s31 = scalar_select %p30, 0, %s29
      %s32 = ssub.s32 %s19, %s31
      %s33 = ssub.s32 %s20, %s27
      %s34 = sor.u32 %s32, %s33
      %p35 = scmp.eq.s32.totalorder %s34, 0
      %s37 = sadd.s32 %s36, 1
      %s38 = scalar_select %p35, %s36, %s37
      %p41 = pneg %p35
      %p42 = scmp.eq.s32.totalorder %s12, 1
      %p43 = por %p41, %p42
      %p44 = scmp.ne.s32.totalorder %s36, %s39
      %p45 = scmp.eq.s32.totalorder %s12, 0
      %p46 = por %p44, %p45
      %p47 = scmp.ne.s32.totalorder %s36, %s39
      %p48 = scmp.eq.s32.totalorder %s17, 1
      %p49 = por %p47, %p48
      %p50 = scmp.ne.s32.totalorder %s39, %s40
      %p51 = scmp.eq.s32.totalorder %s17, 0
      %p52 = por %p50, %p51
      %p53 = scmp.ne.s32.totalorder %s39, %s40
      %p54 = scmp.eq.s32.totalorder %s18, 1
      %p55 = por %p53, %p54
      %p57 = scmp.ne.s32.totalorder %s40, %s56
      %p58 = scmp.eq.s32.totalorder %s18, 0
      %p59 = por %p57, %p58
      %s61 = sadd.s32 %s60, 1
      %p64 = scmp.eq.s32.totalorder %s12, 1
      %p65 = scmp.ne.s32.totalorder %s60, %s62
      %p66 = scmp.eq.s32.totalorder %s12, 0
      %p67 = por %p65, %p66
      %p68 = scmp.ne.s32.totalorder %s60, %s62
      %p69 = scmp.eq.s32.totalorder %s17, 1
      %p70 = por %p68, %p69
      %p71 = scmp.ne.s32.totalorder %s62, %s63
      %p72 = scmp.eq.s32.totalorder %s17, 0
      %p73 = por %p71, %p72
      %p74 = scmp.ne.s32.totalorder %s62, %s63
      %p75 = scmp.eq.s32.totalorder %s18, 1
      %p76 = por %p74, %p75
      %p78 = scmp.ne.s32.totalorder %s63, %s77
      %p79 = scmp.eq.s32.totalorder %s18, 0
      %p80 = por %p78, %p79
      %s82 = sadd.s32 %s81, 1
      %p85 = scmp.eq.s32.totalorder %s12, 1
      %p86 = scmp.ne.s32.totalorder %s81, %s83
      %p87 = scmp.eq.s32.totalorder %s12, 0
      %p88 = por %p86, %p87
      %p89 = scmp.ne.s32.totalorder %s81, %s83
      %p90 = scmp.eq.s32.totalorder %s17, 1
      %p91 = por %p89, %p90
      %p92 = scmp.ne.s32.totalorder %s83, %s84
      %p93 = scmp.eq.s32.totalorder %s17, 0
      %p94 = por %p92, %p93
      %p95 = scmp.ne.s32.totalorder %s83, %s84
      %p96 = scmp.eq.s32.totalorder %s18, 1
      %p97 = por %p95, %p96
      %p99 = scmp.ne.s32.totalorder %s84, %s98
      %p100 = scmp.eq.s32.totalorder %s18, 0
      %p101 = por %p99, %p100
      %s102 = ssub.s32 %s19, %s31
      %s103 = ssub.s32 %s20, %s27
      %s104 = sor.u32 %s102, %s103
      %p105 = scmp.eq.s32.totalorder %s104, 0
      %s107 = sadd.s32 %s106, 1
      %s108 = scalar_select %p105, %s106, %s107
      %p111 = pneg %p105
      %p112 = scmp.eq.s32.totalorder %s12, 1
      %p113 = por %p111, %p112
      %p114 = scmp.ne.s32.totalorder %s106, %s109
      %p115 = scmp.eq.s32.totalorder %s12, 0
      %p116 = por %p114, %p115
      %p117 = scmp.ne.s32.totalorder %s106, %s109
      %p118 = scmp.eq.s32.totalorder %s17, 1
      %p119 = por %p117, %p118
      %p120 = scmp.ne.s32.totalorder %s109, %s110
      %p121 = scmp.eq.s32.totalorder %s17, 0
      %p122 = por %p120, %p121
      %p123 = scmp.ne.s32.totalorder %s109, %s110
      %p124 = scmp.eq.s32.totalorder %s18, 1
      %p125 = por %p123, %p124
      %p127 = scmp.ne.s32.totalorder %s110, %s126
      %p128 = scmp.eq.s32.totalorder %s18, 0
      %p129 = por %p127, %p128
      %p130 = scmp.le.s32.totalorder 1, %s12
      %p131 = scmp.lt.s32.totalorder %s12, 3
      %p132 = pnand %p130, %p131
      %p133 = pneg %p132
      // Predicated region
      $region9: #{lightweight_conv2d.3} parent=5 // pred_check
        _
      $region10: #{lightweight_conv2d.3} parent=5 // pred_check_branch
        %135 = sbr.rel (%p132) target = $region12
      $region11: #{lightweight_conv2d.3} parent=5 // pred_region
        %s136 = ssub.s32 %s12, 1
        // Predicated region
        $region13: #{lightweight_conv2d.3} parent=11 // pred_check
          %p137 = pneg %p73
        $region14: #{lightweight_conv2d.3} parent=11 // pred_check_branch
          %139 = sbr.rel (%p137) target = $region16
        $region15: #{lightweight_conv2d.3} parent=11 // pred_region
          _
        $region16: #{lightweight_conv2d.3} parent=11 // pred_fallthru
          _
        // Predicated region
        $region17: #{lightweight_conv2d.3} parent=11 // pred_check
          %p140 = pneg %p94
        $region18: #{lightweight_conv2d.3} parent=11 // pred_check_branch
          %142 = sbr.rel (%p140) target = $region20
        $region19: #{lightweight_conv2d.3} parent=11 // pred_region
          _
        $region20: #{lightweight_conv2d.3} parent=11 // pred_fallthru
          _
      $region12: #{lightweight_conv2d.3} parent=5 // pred_fallthru
        _
      %p143 = scmp.lt.s32.totalorder %s12, 2
      // Predicated region
      $region21: #{lightweight_conv2d.3} parent=5 // pred_check
        %p144 = pneg %p143
      $region22: #{lightweight_conv2d.3} parent=5 // pred_check_branch
        %146 = sbr.rel (%p144) target = $region24
      $region23: #{lightweight_conv2d.3} parent=5 // pred_region
        // Predicated region
        $region25: #{lightweight_conv2d.3} parent=23 // pred_check
          %p147 = pneg %p46
        $region26: #{lightweight_conv2d.3} parent=23 // pred_check_branch
          %149 = sbr.rel (%p147) target = $region28
        $region27: #{lightweight_conv2d.3} parent=23 // pred_region
          %p150 = scmp.lt.s32.totalorder %s19, 1
          %s151 = scalar_select %p150, %s19, 1
          %p152 = scmp.lt.s32.totalorder %s20, 0
          %s153 = scalar_select %p152, %s20, 0
          %s154 = smul.addr %s153, 3
          %s155 = smul.addr %s151, 3
          %s156 = sadd.s32 %s154, %s155
          %s157 = smul.addr %s156, 4
          %s158 = scalar_lea.vmem %s0, %s157
        $region28: #{lightweight_conv2d.3} parent=23 // pred_fallthru
          _
      $region24: #{lightweight_conv2d.3} parent=5 // pred_fallthru
        _
      %p159 = scmp.le.s32.totalorder 1, %s12
      %p160 = scmp.lt.s32.totalorder %s12, 3
      %p161 = pnand %p159, %p160
      %p162 = pneg %p161
      // Predicated region
      $region29: #{lightweight_conv2d.3} parent=5 // pred_check
        _
      $region30: #{lightweight_conv2d.3} parent=5 // pred_check_branch
        %164 = sbr.rel (%p161) target = $region32
      $region31: #{lightweight_conv2d.3} parent=5 // pred_region
        %s165 = ssub.s32 %s12, 1
        %p166 = scmp.lt.s32.totalorder %s21, 1
        %s167 = scalar_select %p166, %s21, 1
        %p168 = scmp.lt.s32.totalorder %s22, 0
        %s169 = scalar_select %p168, %s22, 0
        %s170 = smul.addr %s169, 3
        %s171 = smul.addr %s167, 3
        %s172 = sadd.s32 %s170, %s171
        %s173 = smul.addr %s172, 4
        %s174 = scalar_lea.vmem %s0, %s173
        %p175 = pneg %p52
        %p176 = pneg %p49
        %p177 = pneg %p73
        %p178 = pneg %p70
        %p179 = pneg %p94
        %p180 = pneg %p91
        %p181 = pneg %p122
        %p182 = pneg %p119
        %s183 = sand.u32 %s109, 1
        %s184 = scalar_lea.sflag [#allocation3], %s183
        %s185 = sand.u32 %s109, 1
        %s186 = smul.addr %s185, 128
        %s187 = scalar_lea.vmem [#allocation2], %s186
        %p188 = scmp.lt.s32.totalorder %s21, 1
        %s189 = scalar_select %p188, %s21, 1
        %p190 = scmp.lt.s32.totalorder %s22, 0
        %s191 = scalar_select %p190, %s22, 0
        %s192 = smul.addr %s191, 3
        %s193 = smul.addr %s189, 3
        %s194 = sadd.s32 %s192, %s193
        %s195 = smul.addr %s194, 4
        %s196 = scalar_lea.vmem %s0, %s195
        %s197 = smul.u32 2, %s22
        %v198 = vld [vmem:[%s196] sm:$0xff]
        %v199 = vld [vmem:[%s196 + $0x8] sm:$0xf]
        %v200 = vunpack.c.l.bf16 %v198
        %v201 = vunpack.c.h.bf16 %v198
        %v202 = vunpack.c.l.bf16 %v199
        %v203 = vld [vmem:[%s1] sm:$0xff]
        %v204 = vld [vmem:[%s2] sm:$0xff]
        %206 = vset.pattern.permute.xlu0 0
        %207 = vperm.xlu0 %206, %v203
        %v208 = vpop.permute.xlu0 %207
        %v210 = vmul.f32 %v200, %v208
        %212 = vset.pattern.permute.xlu0 0
        %213 = vperm.xlu0 %212, %v204
        %v214 = vpop.permute.xlu0 %213
        %v216 = vadd.f32 %v210, %v214
        %v217 = vmax.f32 %v216, 0.0
        %v219 = vcombine.high %v217, %v217
        %v221 = vunpack.c.l.s4 1966171168
        %v222 = vunpack.c.0.s8 %v221
        %v223 = vlaneseq
        %v224 = vshrl.u32 %v223, 7
        %v225 = vsub.s32 %v222, %v224
        %v226 = vrot.slane %v217, %v225
        %v228 = vunpack.c.l.s4 1966171168
        %v229 = vunpack.c.0.s8 %v228
        %v230 = vlaneseq
        %v231 = vshrl.u32 %v230, 7
        %v232 = vsub.s32 %v229, %v231
        %v233 = vrot.slane %v219, %v232
        %v234 = vcombine.high %v226, %v226
        %v235 = vcombine.high %v233, %v233
        %v237 = vunpack.c.l.s4 1966171168
        %v238 = vunpack.c.0.s8 %v237
        %v239 = vlaneseq
        %v240 = vshrl.u32 %v239, 7
        %v241 = vsub.s32 %v238, %v240
        %v242 = vrot.slane %v226, %v241
        %v244 = vunpack.c.l.s4 1966171168
        %v245 = vunpack.c.0.s8 %v244
        %v246 = vlaneseq
        %v247 = vshrl.u32 %v246, 7
        %v248 = vsub.s32 %v245, %v247
        %v249 = vrot.slane %v233, %v248
        %v251 = vunpack.c.l.s4 1966171168
        %v252 = vunpack.c.0.s8 %v251
        %v253 = vlaneseq
        %v254 = vshrl.u32 %v253, 7
        %v255 = vsub.s32 %v252, %v254
        %v256 = vrot.slane %v234, %v255
        %v258 = vunpack.c.l.s4 1966171168
        %v259 = vunpack.c.0.s8 %v258
        %v260 = vlaneseq
        %v261 = vshrl.u32 %v260, 7
        %v262 = vsub.s32 %v259, %v261
        %v263 = vrot.slane %v235, %v262
        %v264 = vcombine.high %v242, %v242
        %v265 = vcombine.high %v249, %v249
        %v266 = vcombine.high %v256, %v256
        %v267 = vcombine.high %v263, %v263
        %vm276 = vcmask 122880
        %277 = vst.msk [vmem:[%s187] sm:$0x1] %vm276, %v242
        %278 = vst.msk [vmem:[%s187 + $0x10] sm:$0x1] %vm276, %v256
        %279 = vst.msk [vmem:[%s187 + $0x20] sm:$0x1] %vm276, %v264
        %280 = vst.msk [vmem:[%s187 + $0x30] sm:$0x1] %vm276, %v266
        %281 = vst.msk [vmem:[%s187 + $0x40] sm:$0x1] %vm276, %v249
        %282 = vst.msk [vmem:[%s187 + $0x50] sm:$0x1] %vm276, %v263
        %283 = vst.msk [vmem:[%s187 + $0x60] sm:$0x1] %vm276, %v265
        %284 = vst.msk [vmem:[%s187 + $0x70] sm:$0x1] %vm276, %v267
        %v285 = vlaneseq
        %v286 = vshrl.u32 %v285, 7
        %v287 = vsub.s32 0, %v286
        %v288 = vrot.slane %v242, %v287
        %v289 = vlaneseq
        %v290 = vshrl.u32 %v289, 7
        %v291 = vsub.s32 0, %v290
        %v292 = vrot.slane %v256, %v291
        %v293 = vlaneseq
        %v294 = vshrl.u32 %v293, 7
        %v295 = vsub.s32 0, %v294
        %v296 = vrot.slane %v264, %v295
        %v297 = vlaneseq
        %v298 = vshrl.u32 %v297, 7
        %v299 = vsub.s32 0, %v298
        %v300 = vrot.slane %v266, %v299
        %v301 = vlaneseq
        %v302 = vshrl.u32 %v301, 7
        %v303 = vsub.s32 0, %v302
        %v304 = vrot.slane %v249, %v303
        %v305 = vlaneseq
        %v306 = vshrl.u32 %v305, 7
        %v307 = vsub.s32 0, %v306
        %v308 = vrot.slane %v263, %v307
        %v309 = vlaneseq
        %v310 = vshrl.u32 %v309, 7
        %v311 = vsub.s32 0, %v310
        %v312 = vrot.slane %v265, %v311
        %v313 = vlaneseq
        %v314 = vshrl.u32 %v313, 7
        %v315 = vsub.s32 0, %v314
        %v316 = vrot.slane %v267, %v315
        %317 = vrot.lane.b32.xlu0 %v288, 110
        %v318 = vpop.permute.xlu0 %317
        %319 = vrot.lane.b32.xlu0 %v292, 110
        %v320 = vpop.permute.xlu0 %319
        %321 = vrot.lane.b32.xlu0 %v296, 110
        %v322 = vpop.permute.xlu0 %321
        %323 = vrot.lane.b32.xlu0 %v300, 110
        %v324 = vpop.permute.xlu0 %323
        %325 = vrot.lane.b32.xlu0 %v304, 110
        %v326 = vpop.permute.xlu0 %325
        %327 = vrot.lane.b32.xlu0 %v308, 110
        %v328 = vpop.permute.xlu0 %327
        %329 = vrot.lane.b32.xlu0 %v312, 110
        %v330 = vpop.permute.xlu0 %329
        %331 = vrot.lane.b32.xlu0 %v316, 110
        %v332 = vpop.permute.xlu0 %331
        %341 = vst.msk [vmem:[%s187 + $0x1] sm:$0x1] %vm276, %v318
        %342 = vst.msk [vmem:[%s187 + $0x11] sm:$0x1] %vm276, %v320
        %343 = vst.msk [vmem:[%s187 + $0x21] sm:$0x1] %vm276, %v322
        %344 = vst.msk [vmem:[%s187 + $0x31] sm:$0x1] %vm276, %v324
        %345 = vst.msk [vmem:[%s187 + $0x41] sm:$0x1] %vm276, %v326
        %346 = vst.msk [vmem:[%s187 + $0x51] sm:$0x1] %vm276, %v328
        %347 = vst.msk [vmem:[%s187 + $0x61] sm:$0x1] %vm276, %v330
        %348 = vst.msk [vmem:[%s187 + $0x71] sm:$0x1] %vm276, %v332
        %349 = vrot.lane.b32.xlu0 %v288, 92
        %v350 = vpop.permute.xlu0 %349
        %351 = vrot.lane.b32.xlu0 %v292, 92
        %v352 = vpop.permute.xlu0 %351
        %353 = vrot.lane.b32.xlu0 %v296, 92
        %v354 = vpop.permute.xlu0 %353
        %355 = vrot.lane.b32.xlu0 %v300, 92
        %v356 = vpop.permute.xlu0 %355
        %357 = vrot.lane.b32.xlu0 %v304, 92
        %v358 = vpop.permute.xlu0 %357
        %359 = vrot.lane.b32.xlu0 %v308, 92
        %v360 = vpop.permute.xlu0 %359
        %361 = vrot.lane.b32.xlu0 %v312, 92
        %v362 = vpop.permute.xlu0 %361
        %363 = vrot.lane.b32.xlu0 %v316, 92
        %v364 = vpop.permute.xlu0 %363
        %373 = vst.msk [vmem:[%s187 + $0x2] sm:$0x1] %vm276, %v350
        %374 = vst.msk [vmem:[%s187 + $0x12] sm:$0x1] %vm276, %v352
        %375 = vst.msk [vmem:[%s187 + $0x22] sm:$0x1] %vm276, %v354
        %376 = vst.msk [vmem:[%s187 + $0x32] sm:$0x1] %vm276, %v356
        %377 = vst.msk [vmem:[%s187 + $0x42] sm:$0x1] %vm276, %v358
        %378 = vst.msk [vmem:[%s187 + $0x52] sm:$0x1] %vm276, %v360
        %379 = vst.msk [vmem:[%s187 + $0x62] sm:$0x1] %vm276, %v362
        %380 = vst.msk [vmem:[%s187 + $0x72] sm:$0x1] %vm276, %v364
        %381 = vrot.lane.b32.xlu0 %v288, 74
        %v382 = vpop.permute.xlu0 %381
        %383 = vrot.lane.b32.xlu0 %v292, 74
        %v384 = vpop.permute.xlu0 %383
        %385 = vrot.lane.b32.xlu0 %v296, 74
        %v386 = vpop.permute.xlu0 %385
        %387 = vrot.lane.b32.xlu0 %v300, 74
        %v388 = vpop.permute.xlu0 %387
        %389 = vrot.lane.b32.xlu0 %v304, 74
        %v390 = vpop.permute.xlu0 %389
        %391 = vrot.lane.b32.xlu0 %v308, 74
        %v392 = vpop.permute.xlu0 %391
        %393 = vrot.lane.b32.xlu0 %v312, 74
        %v394 = vpop.permute.xlu0 %393
        %395 = vrot.lane.b32.xlu0 %v316, 74
        %v396 = vpop.permute.xlu0 %395
        %405 = vst.msk [vmem:[%s187 + $0x3] sm:$0x1] %vm276, %v382
        %406 = vst.msk [vmem:[%s187 + $0x13] sm:$0x1] %vm276, %v384
        %407 = vst.msk [vmem:[%s187 + $0x23] sm:$0x1] %vm276, %v386
        %408 = vst.msk [vmem:[%s187 + $0x33] sm:$0x1] %vm276, %v388
        %409 = vst.msk [vmem:[%s187 + $0x43] sm:$0x1] %vm276, %v390
        %410 = vst.msk [vmem:[%s187 + $0x53] sm:$0x1] %vm276, %v392
        %411 = vst.msk [vmem:[%s187 + $0x63] sm:$0x1] %vm276, %v394
        %412 = vst.msk [vmem:[%s187 + $0x73] sm:$0x1] %vm276, %v396
        %413 = vrot.lane.b32.xlu0 %v288, 56
        %v414 = vpop.permute.xlu0 %413
        %415 = vrot.lane.b32.xlu0 %v292, 56
        %v416 = vpop.permute.xlu0 %415
        %417 = vrot.lane.b32.xlu0 %v296, 56
        %v418 = vpop.permute.xlu0 %417
        %419 = vrot.lane.b32.xlu0 %v300, 56
        %v420 = vpop.permute.xlu0 %419
        %421 = vrot.lane.b32.xlu0 %v304, 56
        %v422 = vpop.permute.xlu0 %421
        %423 = vrot.lane.b32.xlu0 %v308, 56
        %v424 = vpop.permute.xlu0 %423
        %425 = vrot.lane.b32.xlu0 %v312, 56
        %v426 = vpop.permute.xlu0 %425
        %427 = vrot.lane.b32.xlu0 %v316, 56
        %v428 = vpop.permute.xlu0 %427
        %437 = vst.msk [vmem:[%s187 + $0x4] sm:$0x1] %vm276, %v414
        %438 = vst.msk [vmem:[%s187 + $0x14] sm:$0x1] %vm276, %v416
        %439 = vst.msk [vmem:[%s187 + $0x24] sm:$0x1] %vm276, %v418
        %440 = vst.msk [vmem:[%s187 + $0x34] sm:$0x1] %vm276, %v420
        %441 = vst.msk [vmem:[%s187 + $0x44] sm:$0x1] %vm276, %v422
        %442 = vst.msk [vmem:[%s187 + $0x54] sm:$0x1] %vm276, %v424
        %443 = vst.msk [vmem:[%s187 + $0x64] sm:$0x1] %vm276, %v426
        %444 = vst.msk [vmem:[%s187 + $0x74] sm:$0x1] %vm276, %v428
        %445 = vrot.lane.b32.xlu0 %v288, 38
        %v446 = vpop.permute.xlu0 %445
        %447 = vrot.lane.b32.xlu0 %v292, 38
        %v448 = vpop.permute.xlu0 %447
        %449 = vrot.lane.b32.xlu0 %v296, 38
        %v450 = vpop.permute.xlu0 %449
        %451 = vrot.lane.b32.xlu0 %v300, 38
        %v452 = vpop.permute.xlu0 %451
        %453 = vrot.lane.b32.xlu0 %v304, 38
        %v454 = vpop.permute.xlu0 %453
        %455 = vrot.lane.b32.xlu0 %v308, 38
        %v456 = vpop.permute.xlu0 %455
        %457 = vrot.lane.b32.xlu0 %v312, 38
        %v458 = vpop.permute.xlu0 %457
        %459 = vrot.lane.b32.xlu0 %v316, 38
        %v460 = vpop.permute.xlu0 %459
        %469 = vst.msk [vmem:[%s187 + $0x5] sm:$0x1] %vm276, %v446
        %470 = vst.msk [vmem:[%s187 + $0x15] sm:$0x1] %vm276, %v448
        %471 = vst.msk [vmem:[%s187 + $0x25] sm:$0x1] %vm276, %v450
        %472 = vst.msk [vmem:[%s187 + $0x35] sm:$0x1] %vm276, %v452
        %473 = vst.msk [vmem:[%s187 + $0x45] sm:$0x1] %vm276, %v454
        %474 = vst.msk [vmem:[%s187 + $0x55] sm:$0x1] %vm276, %v456
        %475 = vst.msk [vmem:[%s187 + $0x65] sm:$0x1] %vm276, %v458
        %476 = vst.msk [vmem:[%s187 + $0x75] sm:$0x1] %vm276, %v460
        %477 = vrot.lane.b32.xlu0 %v288, 20
        %v478 = vpop.permute.xlu0 %477
        %479 = vrot.lane.b32.xlu0 %v292, 20
        %v480 = vpop.permute.xlu0 %479
        %481 = vrot.lane.b32.xlu0 %v296, 20
        %v482 = vpop.permute.xlu0 %481
        %483 = vrot.lane.b32.xlu0 %v300, 20
        %v484 = vpop.permute.xlu0 %483
        %485 = vrot.lane.b32.xlu0 %v304, 20
        %v486 = vpop.permute.xlu0 %485
        %487 = vrot.lane.b32.xlu0 %v308, 20
        %v488 = vpop.permute.xlu0 %487
        %489 = vrot.lane.b32.xlu0 %v312, 20
        %v490 = vpop.permute.xlu0 %489
        %491 = vrot.lane.b32.xlu0 %v316, 20
        %v492 = vpop.permute.xlu0 %491
        %501 = vst.msk [vmem:[%s187 + $0x6] sm:$0x1] %vm276, %v478
        %502 = vst.msk [vmem:[%s187 + $0x16] sm:$0x1] %vm276, %v480
        %503 = vst.msk [vmem:[%s187 + $0x26] sm:$0x1] %vm276, %v482
        %504 = vst.msk [vmem:[%s187 + $0x36] sm:$0x1] %vm276, %v484
        %505 = vst.msk [vmem:[%s187 + $0x46] sm:$0x1] %vm276, %v486
        %506 = vst.msk [vmem:[%s187 + $0x56] sm:$0x1] %vm276, %v488
        %507 = vst.msk [vmem:[%s187 + $0x66] sm:$0x1] %vm276, %v490
        %508 = vst.msk [vmem:[%s187 + $0x76] sm:$0x1] %vm276, %v492
        %v509 = vmul.f32 %v201, %v208
        %v510 = vadd.f32 %v509, %v214
        %v511 = vmax.f32 %v510, 0.0
        %v513 = vcombine.low %v217, %v511
        %v514 = vcombine.high %v217, %v511
        %v516 = vunpack.c.l.s4 1966171168
        %v517 = vunpack.c.0.s8 %v516
        %v518 = vlaneseq
        %v519 = vshrl.u32 %v518, 7
        %v520 = vsub.s32 %v517, %v519
        %v521 = vrot.slane %v513, %v520
        %v523 = vunpack.c.l.s4 1966171168
        %v524 = vunpack.c.0.s8 %v523
        %v525 = vlaneseq
        %v526 = vshrl.u32 %v525, 7
        %v527 = vsub.s32 %v524, %v526
        %v528 = vrot.slane %v514, %v527
        %v529 = vcombine.high %v521, %v521
        %v530 = vcombine.high %v528, %v528
        %v532 = vunpack.c.l.s4 1966171168
        %v533 = vunpack.c.0.s8 %v532
        %v534 = vlaneseq
        %v535 = vshrl.u32 %v534, 7
        %v536 = vsub.s32 %v533, %v535
        %v537 = vrot.slane %v521, %v536
        %v539 = vunpack.c.l.s4 1966171168
        %v540 = vunpack.c.0.s8 %v539
        %v541 = vlaneseq
        %v542 = vshrl.u32 %v541, 7
        %v543 = vsub.s32 %v540, %v542
        %v544 = vrot.slane %v528, %v543
        %v546 = vunpack.c.l.s4 1966171168
        %v547 = vunpack.c.0.s8 %v546
        %v548 = vlaneseq
        %v549 = vshrl.u32 %v548, 7
        %v550 = vsub.s32 %v547, %v549
        %v551 = vrot.slane %v529, %v550
        %v553 = vunpack.c.l.s4 1966171168
        %v554 = vunpack.c.0.s8 %v553
        %v555 = vlaneseq
        %v556 = vshrl.u32 %v555, 7
        %v557 = vsub.s32 %v554, %v556
        %v558 = vrot.slane %v530, %v557
        %v559 = vcombine.high %v537, %v537
        %v560 = vcombine.high %v544, %v544
        %v561 = vcombine.high %v551, %v551
        %v562 = vcombine.high %v558, %v558
        %v563 = vlaneseq
        %v564 = vshrl.u32 %v563, 7
        %v565 = vsub.s32 0, %v564
        %v566 = vrot.slane %v537, %v565
        %v567 = vlaneseq
        %v568 = vshrl.u32 %v567, 7
        %v569 = vsub.s32 1, %v568
        %v570 = vrot.slane %v537, %v569
        %v571 = vlaneseq
        %v572 = vshrl.u32 %v571, 7
        %v573 = vsub.s32 0, %v572
        %v574 = vrot.slane %v551, %v573
        %v575 = vlaneseq
        %v576 = vshrl.u32 %v575, 7
        %v577 = vsub.s32 1, %v576
        %v578 = vrot.slane %v551, %v577
        %v579 = vlaneseq
        %v580 = vshrl.u32 %v579, 7
        %v581 = vsub.s32 0, %v580
        %v582 = vrot.slane %v559, %v581
        %v583 = vlaneseq
        %v584 = vshrl.u32 %v583, 7
        %v585 = vsub.s32 1, %v584
        %v586 = vrot.slane %v559, %v585
        %v587 = vlaneseq
        %v588 = vshrl.u32 %v587, 7
        %v589 = vsub.s32 0, %v588
        %v590 = vrot.slane %v561, %v589
        %v591 = vlaneseq
        %v592 = vshrl.u32 %v591, 7
        %v593 = vsub.s32 1, %v592
        %v594 = vrot.slane %v561, %v593
        %v595 = vlaneseq
        %v596 = vshrl.u32 %v595, 7
        %v597 = vsub.s32 0, %v596
        %v598 = vrot.slane %v544, %v597
        %v599 = vlaneseq
        %v600 = vshrl.u32 %v599, 7
        %v601 = vsub.s32 1, %v600
        %v602 = vrot.slane %v544, %v601
        %v603 = vlaneseq
        %v604 = vshrl.u32 %v603, 7
        %v605 = vsub.s32 0, %v604
        %v606 = vrot.slane %v558, %v605
        %v607 = vlaneseq
        %v608 = vshrl.u32 %v607, 7
        %v609 = vsub.s32 1, %v608
        %v610 = vrot.slane %v558, %v609
        %v611 = vlaneseq
        %v612 = vshrl.u32 %v611, 7
        %v613 = vsub.s32 0, %v612
        %v614 = vrot.slane %v560, %v613
        %v615 = vlaneseq
        %v616 = vshrl.u32 %v615, 7
        %v617 = vsub.s32 1, %v616
        %v618 = vrot.slane %v560, %v617
        %v619 = vlaneseq
        %v620 = vshrl.u32 %v619, 7
        %v621 = vsub.s32 0, %v620
        %v622 = vrot.slane %v562, %v621
        %v623 = vlaneseq
        %v624 = vshrl.u32 %v623, 7
        %v625 = vsub.s32 1, %v624
        %v626 = vrot.slane %v562, %v625
        %627 = vrot.lane.b32.xlu0 %v566, 2
        %v628 = vpop.permute.xlu0 %627
        %629 = vrot.lane.b32.xlu0 %v570, 2
        %v630 = vpop.permute.xlu0 %629
        %631 = vrot.lane.b32.xlu0 %v574, 2
        %v632 = vpop.permute.xlu0 %631
        %633 = vrot.lane.b32.xlu0 %v578, 2
        %v634 = vpop.permute.xlu0 %633
        %635 = vrot.lane.b32.xlu0 %v582, 2
        %v636 = vpop.permute.xlu0 %635
        %637 = vrot.lane.b32.xlu0 %v586, 2
        %v638 = vpop.permute.xlu0 %637
        %639 = vrot.lane.b32.xlu0 %v590, 2
        %v640 = vpop.permute.xlu0 %639
        %641 = vrot.lane.b32.xlu0 %v594, 2
        %v642 = vpop.permute.xlu0 %641
        %643 = vrot.lane.b32.xlu0 %v598, 2
        %v644 = vpop.permute.xlu0 %643
        %645 = vrot.lane.b32.xlu0 %v602, 2
        %v646 = vpop.permute.xlu0 %645
        %647 = vrot.lane.b32.xlu0 %v606, 2
        %v648 = vpop.permute.xlu0 %647
        %649 = vrot.lane.b32.xlu0 %v610, 2
        %v650 = vpop.permute.xlu0 %649
        %651 = vrot.lane.b32.xlu0 %v614, 2
        %v652 = vpop.permute.xlu0 %651
        %653 = vrot.lane.b32.xlu0 %v618, 2
        %v654 = vpop.permute.xlu0 %653
        %655 = vrot.lane.b32.xlu0 %v622, 2
        %v656 = vpop.permute.xlu0 %655
        %657 = vrot.lane.b32.xlu0 %v626, 2
        %v658 = vpop.permute.xlu0 %657
        %vm659 = vcmask 15360
        %v660 = vsel %vm659, %v628, %v630
        %v661 = vsel %vm659, %v632, %v634
        %v662 = vsel %vm659, %v636, %v638
        %v663 = vsel %vm659, %v640, %v642
        %v664 = vsel %vm659, %v644, %v646
        %v665 = vsel %vm659, %v648, %v650
        %v666 = vsel %vm659, %v652, %v654
        %v667 = vsel %vm659, %v656, %v658
        %676 = vst.msk [vmem:[%s187 + $0x7] sm:$0x1] %vm276, %v660
        %677 = vst.msk [vmem:[%s187 + $0x17] sm:$0x1] %vm276, %v661
        %678 = vst.msk [vmem:[%s187 + $0x27] sm:$0x1] %vm276, %v662
        %679 = vst.msk [vmem:[%s187 + $0x37] sm:$0x1] %vm276, %v663
        %680 = vst.msk [vmem:[%s187 + $0x47] sm:$0x1] %vm276, %v664
        %681 = vst.msk [vmem:[%s187 + $0x57] sm:$0x1] %vm276, %v665
        %682 = vst.msk [vmem:[%s187 + $0x67] sm:$0x1] %vm276, %v666
        %683 = vst.msk [vmem:[%s187 + $0x77] sm:$0x1] %vm276, %v667
        %v684 = vcombine.high %v511, %v511
        %v686 = vunpack.c.l.s4 1966171168
        %v687 = vunpack.c.0.s8 %v686
        %v688 = vlaneseq
        %v689 = vshrl.u32 %v688, 7
        %v690 = vsub.s32 %v687, %v689
        %v691 = vrot.slane %v511, %v690
        %v693 = vunpack.c.l.s4 1966171168
        %v694 = vunpack.c.0.s8 %v693
        %v695 = vlaneseq
        %v696 = vshrl.u32 %v695, 7
        %v697 = vsub.s32 %v694, %v696
        %v698 = vrot.slane %v684, %v697
        %v699 = vcombine.high %v691, %v691
        %v700 = vcombine.high %v698, %v698
        %v702 = vunpack.c.l.s4 1966171168
        %v703 = vunpack.c.0.s8 %v702
        %v704 = vlaneseq
        %v705 = vshrl.u32 %v704, 7
        %v706 = vsub.s32 %v703, %v705
        %v707 = vrot.slane %v691, %v706
        %v709 = vunpack.c.l.s4 1966171168
        %v710 = vunpack.c.0.s8 %v709
        %v711 = vlaneseq
        %v712 = vshrl.u32 %v711, 7
        %v713 = vsub.s32 %v710, %v712
        %v714 = vrot.slane %v698, %v713
        %v716 = vunpack.c.l.s4 1966171168
        %v717 = vunpack.c.0.s8 %v716
        %v718 = vlaneseq
        %v719 = vshrl.u32 %v718, 7
        %v720 = vsub.s32 %v717, %v719
        %v721 = vrot.slane %v699, %v720
        %v723 = vunpack.c.l.s4 1966171168
        %v724 = vunpack.c.0.s8 %v723
        %v725 = vlaneseq
        %v726 = vshrl.u32 %v725, 7
        %v727 = vsub.s32 %v724, %v726
        %v728 = vrot.slane %v700, %v727
        %v729 = vcombine.high %v707, %v707
        %v730 = vcombine.high %v714, %v714
        %v731 = vcombine.high %v721, %v721
        %v732 = vcombine.high %v728, %v728
        %v733 = vlaneseq
        %v734 = vshrl.u32 %v733, 7
        %v735 = vsub.s32 0, %v734
        %v736 = vrot.slane %v707, %v735
        %v737 = vlaneseq
        %v738 = vshrl.u32 %v737, 7
        %v739 = vsub.s32 0, %v738
        %v740 = vrot.slane %v721, %v739
        %v741 = vlaneseq
        %v742 = vshrl.u32 %v741, 7
        %v743 = vsub.s32 0, %v742
        %v744 = vrot.slane %v729, %v743
        %v745 = vlaneseq
        %v746 = vshrl.u32 %v745, 7
        %v747 = vsub.s32 0, %v746
        %v748 = vrot.slane %v731, %v747
        %v749 = vlaneseq
        %v750 = vshrl.u32 %v749, 7
        %v751 = vsub.s32 0, %v750
        %v752 = vrot.slane %v714, %v751
        %v753 = vlaneseq
        %v754 = vshrl.u32 %v753, 7
        %v755 = vsub.s32 0, %v754
        %v756 = vrot.slane %v728, %v755
        %v757 = vlaneseq
        %v758 = vshrl.u32 %v757, 7
        %v759 = vsub.s32 0, %v758
        %v760 = vrot.slane %v730, %v759
        %v761 = vlaneseq
        %v762 = vshrl.u32 %v761, 7
        %v763 = vsub.s32 0, %v762
        %v764 = vrot.slane %v732, %v763
        %765 = vrot.lane.b32.xlu0 %v736, 112
        %v766 = vpop.permute.xlu0 %765
        %767 = vrot.lane.b32.xlu0 %v740, 112
        %v768 = vpop.permute.xlu0 %767
        %769 = vrot.lane.b32.xlu0 %v744, 112
        %v770 = vpop.permute.xlu0 %769
        %771 = vrot.lane.b32.xlu0 %v748, 112
        %v772 = vpop.permute.xlu0 %771
        %773 = vrot.lane.b32.xlu0 %v752, 112
        %v774 = vpop.permute.xlu0 %773
        %775 = vrot.lane.b32.xlu0 %v756, 112
        %v776 = vpop.permute.xlu0 %775
        %777 = vrot.lane.b32.xlu0 %v760, 112
        %v778 = vpop.permute.xlu0 %777
        %779 = vrot.lane.b32.xlu0 %v764, 112
        %v780 = vpop.permute.xlu0 %779
        %789 = vst.msk [vmem:[%s187 + $0x8] sm:$0x1] %vm276, %v766
        %790 = vst.msk [vmem:[%s187 + $0x18] sm:$0x1] %vm276, %v768
        %791 = vst.msk [vmem:[%s187 + $0x28] sm:$0x1] %vm276, %v770
        %792 = vst.msk [vmem:[%s187 + $0x38] sm:$0x1] %vm276, %v772
        %793 = vst.msk [vmem:[%s187 + $0x48] sm:$0x1] %vm276, %v774
        %794 = vst.msk [vmem:[%s187 + $0x58] sm:$0x1] %vm276, %v776
        %795 = vst.msk [vmem:[%s187 + $0x68] sm:$0x1] %vm276, %v778
        %796 = vst.msk [vmem:[%s187 + $0x78] sm:$0x1] %vm276, %v780
        %797 = vrot.lane.b32.xlu0 %v736, 94
        %v798 = vpop.permute.xlu0 %797
        %799 = vrot.lane.b32.xlu0 %v740, 94
        %v800 = vpop.permute.xlu0 %799
        %801 = vrot.lane.b32.xlu0 %v744, 94
        %v802 = vpop.permute.xlu0 %801
        %803 = vrot.lane.b32.xlu0 %v748, 94
        %v804 = vpop.permute.xlu0 %803
        %805 = vrot.lane.b32.xlu0 %v752, 94
        %v806 = vpop.permute.xlu0 %805
        %807 = vrot.lane.b32.xlu0 %v756, 94
        %v808 = vpop.permute.xlu0 %807
        %809 = vrot.lane.b32.xlu0 %v760, 94
        %v810 = vpop.permute.xlu0 %809
        %811 = vrot.lane.b32.xlu0 %v764, 94
        %v812 = vpop.permute.xlu0 %811
        %821 = vst.msk [vmem:[%s187 + $0x9] sm:$0x1] %vm276, %v798
        %822 = vst.msk [vmem:[%s187 + $0x19] sm:$0x1] %vm276, %v800
        %823 = vst.msk [vmem:[%s187 + $0x29] sm:$0x1] %vm276, %v802
        %824 = vst.msk [vmem:[%s187 + $0x39] sm:$0x1] %vm276, %v804
        %825 = vst.msk [vmem:[%s187 + $0x49] sm:$0x1] %vm276, %v806
        %826 = vst.msk [vmem:[%s187 + $0x59] sm:$0x1] %vm276, %v808
        %827 = vst.msk [vmem:[%s187 + $0x69] sm:$0x1] %vm276, %v810
        %828 = vst.msk [vmem:[%s187 + $0x79] sm:$0x1] %vm276, %v812
        %829 = vrot.lane.b32.xlu0 %v736, 76
        %v830 = vpop.permute.xlu0 %829
        %831 = vrot.lane.b32.xlu0 %v740, 76
        %v832 = vpop.permute.xlu0 %831
        %833 = vrot.lane.b32.xlu0 %v744, 76
        %v834 = vpop.permute.xlu0 %833
        %835 = vrot.lane.b32.xlu0 %v748, 76
        %v836 = vpop.permute.xlu0 %835
        %837 = vrot.lane.b32.xlu0 %v752, 76
        %v838 = vpop.permute.xlu0 %837
        %839 = vrot.lane.b32.xlu0 %v756, 76
        %v840 = vpop.permute.xlu0 %839
        %841 = vrot.lane.b32.xlu0 %v760, 76
        %v842 = vpop.permute.xlu0 %841
        %843 = vrot.lane.b32.xlu0 %v764, 76
        %v844 = vpop.permute.xlu0 %843
        %853 = vst.msk [vmem:[%s187 + $0xa] sm:$0x1] %vm276, %v830
        %854 = vst.msk [vmem:[%s187 + $0x1a] sm:$0x1] %vm276, %v832
        %855 = vst.msk [vmem:[%s187 + $0x2a] sm:$0x1] %vm276, %v834
        %856 = vst.msk [vmem:[%s187 + $0x3a] sm:$0x1] %vm276, %v836
        %857 = vst.msk [vmem:[%s187 + $0x4a] sm:$0x1] %vm276, %v838
        %858 = vst.msk [vmem:[%s187 + $0x5a] sm:$0x1] %vm276, %v840
        %859 = vst.msk [vmem:[%s187 + $0x6a] sm:$0x1] %vm276, %v842
        %860 = vst.msk [vmem:[%s187 + $0x7a] sm:$0x1] %vm276, %v844
        %861 = vrot.lane.b32.xlu0 %v736, 58
        %v862 = vpop.permute.xlu0 %861
        %863 = vrot.lane.b32.xlu0 %v740, 58
        %v864 = vpop.permute.xlu0 %863
        %865 = vrot.lane.b32.xlu0 %v744, 58
        %v866 = vpop.permute.xlu0 %865
        %867 = vrot.lane.b32.xlu0 %v748, 58
        %v868 = vpop.permute.xlu0 %867
        %869 = vrot.lane.b32.xlu0 %v752, 58
        %v870 = vpop.permute.xlu0 %869
        %871 = vrot.lane.b32.xlu0 %v756, 58
        %v872 = vpop.permute.xlu0 %871
        %873 = vrot.lane.b32.xlu0 %v760, 58
        %v874 = vpop.permute.xlu0 %873
        %875 = vrot.lane.b32.xlu0 %v764, 58
        %v876 = vpop.permute.xlu0 %875
        %885 = vst.msk [vmem:[%s187 + $0xb] sm:$0x1] %vm276, %v862
        %886 = vst.msk [vmem:[%s187 + $0x1b] sm:$0x1] %vm276, %v864
        %887 = vst.msk [vmem:[%s187 + $0x2b] sm:$0x1] %vm276, %v866
        %888 = vst.msk [vmem:[%s187 + $0x3b] sm:$0x1] %vm276, %v868
        %889 = vst.msk [vmem:[%s187 + $0x4b] sm:$0x1] %vm276, %v870
        %890 = vst.msk [vmem:[%s187 + $0x5b] sm:$0x1] %vm276, %v872
        %891 = vst.msk [vmem:[%s187 + $0x6b] sm:$0x1] %vm276, %v874
        %892 = vst.msk [vmem:[%s187 + $0x7b] sm:$0x1] %vm276, %v876
        %893 = vrot.lane.b32.xlu0 %v736, 40
        %v894 = vpop.permute.xlu0 %893
        %895 = vrot.lane.b32.xlu0 %v740, 40
        %v896 = vpop.permute.xlu0 %895
        %897 = vrot.lane.b32.xlu0 %v744, 40
        %v898 = vpop.permute.xlu0 %897
        %899 = vrot.lane.b32.xlu0 %v748, 40
        %v900 = vpop.permute.xlu0 %899
        %901 = vrot.lane.b32.xlu0 %v752, 40
        %v902 = vpop.permute.xlu0 %901
        %903 = vrot.lane.b32.xlu0 %v756, 40
        %v904 = vpop.permute.xlu0 %903
        %905 = vrot.lane.b32.xlu0 %v760, 40
        %v906 = vpop.permute.xlu0 %905
        %907 = vrot.lane.b32.xlu0 %v764, 40
        %v908 = vpop.permute.xlu0 %907
        %917 = vst.msk [vmem:[%s187 + $0xc] sm:$0x1] %vm276, %v894
        %918 = vst.msk [vmem:[%s187 + $0x1c] sm:$0x1] %vm276, %v896
        %919 = vst.msk [vmem:[%s187 + $0x2c] sm:$0x1] %vm276, %v898
        %920 = vst.msk [vmem:[%s187 + $0x3c] sm:$0x1] %vm276, %v900
        %921 = vst.msk [vmem:[%s187 + $0x4c] sm:$0x1] %vm276, %v902
        %922 = vst.msk [vmem:[%s187 + $0x5c] sm:$0x1] %vm276, %v904
        %923 = vst.msk [vmem:[%s187 + $0x6c] sm:$0x1] %vm276, %v906
        %924 = vst.msk [vmem:[%s187 + $0x7c] sm:$0x1] %vm276, %v908
        %925 = vrot.lane.b32.xlu0 %v736, 22
        %v926 = vpop.permute.xlu0 %925
        %927 = vrot.lane.b32.xlu0 %v740, 22
        %v928 = vpop.permute.xlu0 %927
        %929 = vrot.lane.b32.xlu0 %v744, 22
        %v930 = vpop.permute.xlu0 %929
        %931 = vrot.lane.b32.xlu0 %v748, 22
        %v932 = vpop.permute.xlu0 %931
        %933 = vrot.lane.b32.xlu0 %v752, 22
        %v934 = vpop.permute.xlu0 %933
        %935 = vrot.lane.b32.xlu0 %v756, 22
        %v936 = vpop.permute.xlu0 %935
        %937 = vrot.lane.b32.xlu0 %v760, 22
        %v938 = vpop.permute.xlu0 %937
        %939 = vrot.lane.b32.xlu0 %v764, 22
        %v940 = vpop.permute.xlu0 %939
        %949 = vst.msk [vmem:[%s187 + $0xd] sm:$0x1] %vm276, %v926
        %950 = vst.msk [vmem:[%s187 + $0x1d] sm:$0x1] %vm276, %v928
        %951 = vst.msk [vmem:[%s187 + $0x2d] sm:$0x1] %vm276, %v930
        %952 = vst.msk [vmem:[%s187 + $0x3d] sm:$0x1] %vm276, %v932
        %953 = vst.msk [vmem:[%s187 + $0x4d] sm:$0x1] %vm276, %v934
        %954 = vst.msk [vmem:[%s187 + $0x5d] sm:$0x1] %vm276, %v936
        %955 = vst.msk [vmem:[%s187 + $0x6d] sm:$0x1] %vm276, %v938
        %956 = vst.msk [vmem:[%s187 + $0x7d] sm:$0x1] %vm276, %v940
        %v957 = vmul.f32 %v202, %v208
        %v958 = vadd.f32 %v957, %v214
        %v959 = vmax.f32 %v958, 0.0
        %v961 = vcombine.low %v511, %v959
        %v962 = vcombine.high %v511, %v959
        %v964 = vunpack.c.l.s4 1966171168
        %v965 = vunpack.c.0.s8 %v964
        %v966 = vlaneseq
        %v967 = vshrl.u32 %v966, 7
        %v968 = vsub.s32 %v965, %v967
        %v969 = vrot.slane %v961, %v968
        %v971 = vunpack.c.l.s4 1966171168
        %v972 = vunpack.c.0.s8 %v971
        %v973 = vlaneseq
        %v974 = vshrl.u32 %v973, 7
        %v975 = vsub.s32 %v972, %v974
        %v976 = vrot.slane %v962, %v975
        %v977 = vcombine.high %v969, %v969
        %v978 = vcombine.high %v976, %v976
        %v980 = vunpack.c.l.s4 1966171168
        %v981 = vunpack.c.0.s8 %v980
        %v982 = vlaneseq
        %v983 = vshrl.u32 %v982, 7
        %v984 = vsub.s32 %v981, %v983
        %v985 = vrot.slane %v969, %v984
        %v987 = vunpack.c.l.s4 1966171168
        %v988 = vunpack.c.0.s8 %v987
        %v989 = vlaneseq
        %v990 = vshrl.u32 %v989, 7
        %v991 = vsub.s32 %v988, %v990
        %v992 = vrot.slane %v976, %v991
        %v994 = vunpack.c.l.s4 1966171168
        %v995 = vunpack.c.0.s8 %v994
        %v996 = vlaneseq
        %v997 = vshrl.u32 %v996, 7
        %v998 = vsub.s32 %v995, %v997
        %v999 = vrot.slane %v977, %v998
        %v1001 = vunpack.c.l.s4 1966171168
        %v1002 = vunpack.c.0.s8 %v1001
        %v1003 = vlaneseq
        %v1004 = vshrl.u32 %v1003, 7
        %v1005 = vsub.s32 %v1002, %v1004
        %v1006 = vrot.slane %v978, %v1005
        %v1007 = vcombine.high %v985, %v985
        %v1008 = vcombine.high %v992, %v992
        %v1009 = vcombine.high %v999, %v999
        %v1010 = vcombine.high %v1006, %v1006
        %v1011 = vlaneseq
        %v1012 = vshrl.u32 %v1011, 7
        %v1013 = vsub.s32 0, %v1012
        %v1014 = vrot.slane %v985, %v1013
        %v1015 = vlaneseq
        %v1016 = vshrl.u32 %v1015, 7
        %v1017 = vsub.s32 1, %v1016
        %v1018 = vrot.slane %v985, %v1017
        %v1019 = vlaneseq
        %v1020 = vshrl.u32 %v1019, 7
        %v1021 = vsub.s32 0, %v1020
        %v1022 = vrot.slane %v999, %v1021
        %v1023 = vlaneseq
        %v1024 = vshrl.u32 %v1023, 7
        %v1025 = vsub.s32 1, %v1024
        %v1026 = vrot.slane %v999, %v1025
        %v1027 = vlaneseq
        %v1028 = vshrl.u32 %v1027, 7
        %v1029 = vsub.s32 0, %v1028
        %v1030 = vrot.slane %v1007, %v1029
        %v1031 = vlaneseq
        %v1032 = vshrl.u32 %v1031, 7
        %v1033 = vsub.s32 1, %v1032
        %v1034 = vrot.slane %v1007, %v1033
        %v1035 = vlaneseq
        %v1036 = vshrl.u32 %v1035, 7
        %v1037 = vsub.s32 0, %v1036
        %v1038 = vrot.slane %v1009, %v1037
        %v1039 = vlaneseq
        %v1040 = vshrl.u32 %v1039, 7
        %v1041 = vsub.s32 1, %v1040
        %v1042 = vrot.slane %v1009, %v1041
        %v1043 = vlaneseq
        %v1044 = vshrl.u32 %v1043, 7
        %v1045 = vsub.s32 0, %v1044
        %v1046 = vrot.slane %v992, %v1045
        %v1047 = vlaneseq
        %v1048 = vshrl.u32 %v1047, 7
        %v1049 = vsub.s32 1, %v1048
        %v1050 = vrot.slane %v992, %v1049
        %v1051 = vlaneseq
        %v1052 = vshrl.u32 %v1051, 7
        %v1053 = vsub.s32 0, %v1052
        %v1054 = vrot.slane %v1006, %v1053
        %v1055 = vlaneseq
        %v1056 = vshrl.u32 %v1055, 7
        %v1057 = vsub.s32 1, %v1056
        %v1058 = vrot.slane %v1006, %v1057
        %v1059 = vlaneseq
        %v1060 = vshrl.u32 %v1059, 7
        %v1061 = vsub.s32 0, %v1060
        %v1062 = vrot.slane %v1008, %v1061
        %v1063 = vlaneseq
        %v1064 = vshrl.u32 %v1063, 7
        %v1065 = vsub.s32 1, %v1064
        %v1066 = vrot.slane %v1008, %v1065
        %v1067 = vlaneseq
        %v1068 = vshrl.u32 %v1067, 7
        %v1069 = vsub.s32 0, %v1068
        %v1070 = vrot.slane %v1010, %v1069
        %v1071 = vlaneseq
        %v1072 = vshrl.u32 %v1071, 7
        %v1073 = vsub.s32 1, %v1072
        %v1074 = vrot.slane %v1010, %v1073
        %1075 = vrot.lane.b32.xlu0 %v1014, 4
        %v1076 = vpop.permute.xlu0 %1075
        %1077 = vrot.lane.b32.xlu0 %v1018, 4
        %v1078 = vpop.permute.xlu0 %1077
        %1079 = vrot.lane.b32.xlu0 %v1022, 4
        %v1080 = vpop.permute.xlu0 %1079
        %1081 = vrot.lane.b32.xlu0 %v1026, 4
        %v1082 = vpop.permute.xlu0 %1081
        %1083 = vrot.lane.b32.xlu0 %v1030, 4
        %v1084 = vpop.permute.xlu0 %1083
        %1085 = vrot.lane.b32.xlu0 %v1034, 4
        %v1086 = vpop.permute.xlu0 %1085
        %1087 = vrot.lane.b32.xlu0 %v1038, 4
        %v1088 = vpop.permute.xlu0 %1087
        %1089 = vrot.lane.b32.xlu0 %v1042, 4
        %v1090 = vpop.permute.xlu0 %1089
        %1091 = vrot.lane.b32.xlu0 %v1046, 4
        %v1092 = vpop.permute.xlu0 %1091
        %1093 = vrot.lane.b32.xlu0 %v1050, 4
        %v1094 = vpop.permute.xlu0 %1093
        %1095 = vrot.lane.b32.xlu0 %v1054, 4
        %v1096 = vpop.permute.xlu0 %1095
        %1097 = vrot.lane.b32.xlu0 %v1058, 4
        %v1098 = vpop.permute.xlu0 %1097
        %1099 = vrot.lane.b32.xlu0 %v1062, 4
        %v1100 = vpop.permute.xlu0 %1099
        %1101 = vrot.lane.b32.xlu0 %v1066, 4
        %v1102 = vpop.permute.xlu0 %1101
        %1103 = vrot.lane.b32.xlu0 %v1070, 4
        %v1104 = vpop.permute.xlu0 %1103
        %1105 = vrot.lane.b32.xlu0 %v1074, 4
        %v1106 = vpop.permute.xlu0 %1105
        %vm1107 = vcmask 31744
        %v1108 = vsel %vm1107, %v1076, %v1078
        %v1109 = vsel %vm1107, %v1080, %v1082
        %v1110 = vsel %vm1107, %v1084, %v1086
        %v1111 = vsel %vm1107, %v1088, %v1090
        %v1112 = vsel %vm1107, %v1092, %v1094
        %v1113 = vsel %vm1107, %v1096, %v1098
        %v1114 = vsel %vm1107, %v1100, %v1102
        %v1115 = vsel %vm1107, %v1104, %v1106
        %1124 = vst.msk [vmem:[%s187 + $0xe] sm:$0x1] %vm276, %v1108
        %1125 = vst.msk [vmem:[%s187 + $0x1e] sm:$0x1] %vm276, %v1109
        %1126 = vst.msk [vmem:[%s187 + $0x2e] sm:$0x1] %vm276, %v1110
        %1127 = vst.msk [vmem:[%s187 + $0x3e] sm:$0x1] %vm276, %v1111
        %1128 = vst.msk [vmem:[%s187 + $0x4e] sm:$0x1] %vm276, %v1112
        %1129 = vst.msk [vmem:[%s187 + $0x5e] sm:$0x1] %vm276, %v1113
        %1130 = vst.msk [vmem:[%s187 + $0x6e] sm:$0x1] %vm276, %v1114
        %1131 = vst.msk [vmem:[%s187 + $0x7e] sm:$0x1] %vm276, %v1115
        %v1132 = vcombine.high %v959, %v959
        %v1134 = vunpack.c.l.s4 1966171168
        %v1135 = vunpack.c.0.s8 %v1134
        %v1136 = vlaneseq
        %v1137 = vshrl.u32 %v1136, 7
        %v1138 = vsub.s32 %v1135, %v1137
        %v1139 = vrot.slane %v959, %v1138
        %v1141 = vunpack.c.l.s4 1966171168
        %v1142 = vunpack.c.0.s8 %v1141
        %v1143 = vlaneseq
        %v1144 = vshrl.u32 %v1143, 7
        %v1145 = vsub.s32 %v1142, %v1144
        %v1146 = vrot.slane %v1132, %v1145
        %v1147 = vcombine.high %v1139, %v1139
        %v1148 = vcombine.high %v1146, %v1146
        %v1150 = vunpack.c.l.s4 1966171168
        %v1151 = vunpack.c.0.s8 %v1150
        %v1152 = vlaneseq
        %v1153 = vshrl.u32 %v1152, 7
        %v1154 = vsub.s32 %v1151, %v1153
        %v1155 = vrot.slane %v1139, %v1154
        %v1157 = vunpack.c.l.s4 1966171168
        %v1158 = vunpack.c.0.s8 %v1157
        %v1159 = vlaneseq
        %v1160 = vshrl.u32 %v1159, 7
        %v1161 = vsub.s32 %v1158, %v1160
        %v1162 = vrot.slane %v1146, %v1161
        %v1164 = vunpack.c.l.s4 1966171168
        %v1165 = vunpack.c.0.s8 %v1164
        %v1166 = vlaneseq
        %v1167 = vshrl.u32 %v1166, 7
        %v1168 = vsub.s32 %v1165, %v1167
        %v1169 = vrot.slane %v1147, %v1168
        %v1171 = vunpack.c.l.s4 1966171168
        %v1172 = vunpack.c.0.s8 %v1171
        %v1173 = vlaneseq
        %v1174 = vshrl.u32 %v1173, 7
        %v1175 = vsub.s32 %v1172, %v1174
        %v1176 = vrot.slane %v1148, %v1175
        %v1177 = vcombine.high %v1155, %v1155
        %v1178 = vcombine.high %v1162, %v1162
        %v1179 = vcombine.high %v1169, %v1169
        %v1180 = vcombine.high %v1176, %v1176
        %v1181 = vlaneseq
        %v1182 = vshrl.u32 %v1181, 7
        %v1183 = vsub.s32 0, %v1182
        %v1184 = vrot.slane %v1155, %v1183
        %v1185 = vlaneseq
        %v1186 = vshrl.u32 %v1185, 7
        %v1187 = vsub.s32 0, %v1186
        %v1188 = vrot.slane %v1169, %v1187
        %v1189 = vlaneseq
        %v1190 = vshrl.u32 %v1189, 7
        %v1191 = vsub.s32 0, %v1190
        %v1192 = vrot.slane %v1177, %v1191
        %v1193 = vlaneseq
        %v1194 = vshrl.u32 %v1193, 7
        %v1195 = vsub.s32 0, %v1194
        %v1196 = vrot.slane %v1179, %v1195
        %v1197 = vlaneseq
        %v1198 = vshrl.u32 %v1197, 7
        %v1199 = vsub.s32 0, %v1198
        %v1200 = vrot.slane %v1162, %v1199
        %v1201 = vlaneseq
        %v1202 = vshrl.u32 %v1201, 7
        %v1203 = vsub.s32 0, %v1202
        %v1204 = vrot.slane %v1176, %v1203
        %v1205 = vlaneseq
        %v1206 = vshrl.u32 %v1205, 7
        %v1207 = vsub.s32 0, %v1206
        %v1208 = vrot.slane %v1178, %v1207
        %v1209 = vlaneseq
        %v1210 = vshrl.u32 %v1209, 7
        %v1211 = vsub.s32 0, %v1210
        %v1212 = vrot.slane %v1180, %v1211
        %1213 = vrot.lane.b32.xlu0 %v1184, 114
        %v1214 = vpop.permute.xlu0 %1213
        %1215 = vrot.lane.b32.xlu0 %v1188, 114
        %v1216 = vpop.permute.xlu0 %1215
        %1217 = vrot.lane.b32.xlu0 %v1192, 114
        %v1218 = vpop.permute.xlu0 %1217
        %1219 = vrot.lane.b32.xlu0 %v1196, 114
        %v1220 = vpop.permute.xlu0 %1219
        %1221 = vrot.lane.b32.xlu0 %v1200, 114
        %v1222 = vpop.permute.xlu0 %1221
        %1223 = vrot.lane.b32.xlu0 %v1204, 114
        %v1224 = vpop.permute.xlu0 %1223
        %1225 = vrot.lane.b32.xlu0 %v1208, 114
        %v1226 = vpop.permute.xlu0 %1225
        %1227 = vrot.lane.b32.xlu0 %v1212, 114
        %v1228 = vpop.permute.xlu0 %1227
        %1237 = vst.msk [vmem:[%s187 + $0xf] sm:$0x1] %vm276, %v1214
        %1238 = vst.msk [vmem:[%s187 + $0x1f] sm:$0x1] %vm276, %v1216
        %1239 = vst.msk [vmem:[%s187 + $0x2f] sm:$0x1] %vm276, %v1218
        %1240 = vst.msk [vmem:[%s187 + $0x3f] sm:$0x1] %vm276, %v1220
        %1241 = vst.msk [vmem:[%s187 + $0x4f] sm:$0x1] %vm276, %v1222
        %1242 = vst.msk [vmem:[%s187 + $0x5f] sm:$0x1] %vm276, %v1224
        %1243 = vst.msk [vmem:[%s187 + $0x6f] sm:$0x1] %vm276, %v1226
        %1244 = vst.msk [vmem:[%s187 + $0x7f] sm:$0x1] %vm276, %v1228
        %s1245 = sand.u32 %s109, 1
        %s1246 = scalar_lea.sflag [#allocation3], %s1245
        %s1247 = sand.u32 %s109, 1
        %s1248 = smul.addr %s1247, 128
        %s1249 = scalar_lea.vmem [#allocation2], %s1248
        // Predicated region
        $region33: #{lightweight_conv2d.3} parent=31 // pred_check
          %p1250 = pneg %p119
        $region34: #{lightweight_conv2d.3} parent=31 // pred_check_branch
          %1252 = sbr.rel (%p1250) target = $region36
        $region35: #{lightweight_conv2d.3} parent=31 // pred_region
          %s1253 = smul.u32 2, %s22
          %s1255 = ssub.s32 2048, 2048
          %1256 = vsyncadd %s1246, %s1255
          %s1257 = smul.addr %s21, 16
          %s1258 = sadd.s32 %s1253, %s1257
          %s1259 = smul.addr %s1258, 128
          %s1260 = scalar_lea.hbm %s3, %s1259
          %s1261 = sshll.u32 %s1249, 4
          %s1262 = int_to_ptr.vmem [resolvable:$true] %s1261
          %1267 = dma.vmem_to_hbm [thread:$0]  %s1262, 2048, %s1260, %s1246, 128, 128, 8
        $region36: #{lightweight_conv2d.3} parent=31 // pred_fallthru
          _
      $region32: #{lightweight_conv2d.3} parent=5 // pred_fallthru
        _
      %p1268 = scmp.le.s32.totalorder 2, %s12
      // Predicated region
      $region37: #{lightweight_conv2d.3} parent=5 // pred_check
        %p1269 = pneg %p1268
      $region38: #{lightweight_conv2d.3} parent=5 // pred_check_branch
        %1271 = sbr.rel (%p1269) target = $region40
      $region39: #{lightweight_conv2d.3} parent=5 // pred_region
        %s1272 = ssub.s32 %s12, 2
        // Predicated region
        $region41: #{lightweight_conv2d.3} parent=39 // pred_check
          %p1273 = pneg %p125
        $region42: #{lightweight_conv2d.3} parent=39 // pred_check_branch
          %1275 = sbr.rel (%p1273) target = $region44
        $region43: #{lightweight_conv2d.3} parent=39 // pred_region
          %s1276 = sand.u32 %s110, 1
          %s1277 = scalar_lea.sflag [#allocation3], %s1276
          %s1278 = sand.u32 %s110, 1
          %s1279 = smul.addr %s1278, 128
          %s1280 = scalar_lea.vmem [#allocation2], %s1279
          %1281 = dma.done %s1277, 2048
        $region44: #{lightweight_conv2d.3} parent=39 // pred_fallthru
          _
      $region40: #{lightweight_conv2d.3} parent=5 // pred_fallthru
        _
    $region6: #{lightweight_conv2d.3} parent=1 // loop_footer
      %s16 = sadd.s32 1, %s12
    $region7: #{lightweight_conv2d.3} parent=1 // loop_footer_branch
      %11 = sbr.rel target = $region3
    $region8: #{lightweight_conv2d.3} parent=1 // loop_exit
      _
    %1282 = vsyncpa [#allocation3], 1
    %s1283 = scalar_lea.sflag [#allocation3], 1
    %1284 = vsyncpa %s1283, 1

// kernel: lightweight_conv2d.2
$region0: #{lightweight_conv2d.2}
  #allocation0 [shape = 'u32[]', space=smem, size = 0x4, offset = 0x4, fixed_abs, tag = 'smem constant byte address 0x4 - core index']
  #allocation1 [shape = 'u32[144,128]{1,0:T(1,128)}', space=vmem, size = 0x12000, scoped, tag = 'internal scratch']
  #allocation2 [shape = 'bf16[144,288]{1,0:T(8,128)(2,1)}', space=vmem, size = 0x1b000, scoped, tag = 'scratch operand']
  %s0 = inlined_call_operand.vmem [shape: bf16[2,16,342], index: 0, kind: input, shape index: {}]
  %s1 = inlined_call_operand.vmem [shape: bf16[128,144], index: 1, kind: input, shape index: {}]
  %s2 = inlined_call_operand.vmem [shape: f32[1,288], index: 2, kind: input, shape index: {}]
  %s3 = inlined_call_operand.vmem [shape: bf16[2,1,8,288], index: 3, kind: output, shape index: {0}]
  %s4 = inlined_call_operand.vmem [shape: f32[2,1,128,2], index: 4, kind: output, shape index: {1}]
  %5 = xla_tuple %s3, %s4
  %s6 = sld [smem:[#allocation0]]
  $region53: #{lightweight_conv2d.2} parent=0
    _
  %s8 = ssub.s32 1, %s6
  %s9 = scalar_select 0, %s8, %s6
  loop: start=0, step=1, limit=4
  $region2: #{lightweight_conv2d.2} parent=0 // loop_pre_header
    _
  $region3: #{lightweight_conv2d.2} parent=0 // loop_header
    %s11 = sphi 0, %s15
    %p12 = scmp.ge.s32.totalorder %s11, 4
    %s18 = sphi 0, %s30
    %s19 = sphi 0, %s26
    %s20 = sphi 0, %s18
    %s21 = sphi 0, %s19
    %s22 = sphi 0, %s20
    %s23 = sphi 0, %s21
    %s33 = sphi 0, %s35
    %s36 = sphi 0, %s33
    %s37 = sphi 0, %s36
    %s53 = sphi 0, %s37
    %s57 = sphi 0, %s57
    %s59 = sphi 0, %s57
    %s60 = sphi 0, %s59
    %s74 = sphi 0, %s60
    %s78 = sphi 0, %s78
    %s80 = sphi 0, %s78
    %s81 = sphi 0, %s80
    %s95 = sphi 0, %s81
    %s103 = sphi 0, %s105
    %s106 = sphi 0, %s103
    %s107 = sphi 0, %s106
    %s123 = sphi 0, %s107
    %s131 = sphi 0, %s133
    %s134 = sphi 0, %s131
    %s135 = sphi 0, %s134
    %s151 = sphi 0, %s135
  $region4: #{lightweight_conv2d.2} parent=0 // loop_header_branch
    %14 = sbr.rel (%p12) target = $region8
  $region5: #{lightweight_conv2d.2} parent=0 // loop_body
    %s16 = ssub.s32 %s11, 1
    %s17 = ssub.s32 %s11, 2
    %s24 = sadd.s32 1, %s19
    %p25 = scmp.ge.s32.totalorder %s24, 1
    %s26 = scalar_select %p25, 0, %s24
    %s27 = sadd.s32 1, %s18
    %s28 = scalar_select %p25, %s27, %s18
    %p29 = scmp.ge.s32.totalorder %s28, 2
    %s30 = scalar_select %p29, 0, %s28
    %s31 = ssub.s32 %s18, %s30
    %p32 = scmp.eq.s32.totalorder %s31, 0
    %s34 = sadd.s32 %s33, 1
    %s35 = scalar_select %p32, %s33, %s34
    %p38 = pneg %p32
    %p39 = scmp.eq.s32.totalorder %s11, 1
    %p40 = por %p38, %p39
    %p41 = scmp.ne.s32.totalorder %s33, %s36
    %p42 = scmp.eq.s32.totalorder %s11, 0
    %p43 = por %p41, %p42
    %p44 = scmp.ne.s32.totalorder %s33, %s36
    %p45 = scmp.eq.s32.totalorder %s16, 1
    %p46 = por %p44, %p45
    %p47 = scmp.ne.s32.totalorder %s36, %s37
    %p48 = scmp.eq.s32.totalorder %s16, 0
    %p49 = por %p47, %p48
    %p50 = scmp.ne.s32.totalorder %s36, %s37
    %p51 = scmp.eq.s32.totalorder %s17, 1
    %p52 = por %p50, %p51
    %p54 = scmp.ne.s32.totalorder %s37, %s53
    %p55 = scmp.eq.s32.totalorder %s17, 0
    %p56 = por %p54, %p55
    %s58 = sadd.s32 %s57, 1
    %p61 = scmp.eq.s32.totalorder %s11, 1
    %p62 = scmp.ne.s32.totalorder %s57, %s59
    %p63 = scmp.eq.s32.totalorder %s11, 0
    %p64 = por %p62, %p63
    %p65 = scmp.ne.s32.totalorder %s57, %s59
    %p66 = scmp.eq.s32.totalorder %s16, 1
    %p67 = por %p65, %p66
    %p68 = scmp.ne.s32.totalorder %s59, %s60
    %p69 = scmp.eq.s32.totalorder %s16, 0
    %p70 = por %p68, %p69
    %p71 = scmp.ne.s32.totalorder %s59, %s60
    %p72 = scmp.eq.s32.totalorder %s17, 1
    %p73 = por %p71, %p72
    %p75 = scmp.ne.s32.totalorder %s60, %s74
    %p76 = scmp.eq.s32.totalorder %s17, 0
    %p77 = por %p75, %p76
    %s79 = sadd.s32 %s78, 1
    %p82 = scmp.eq.s32.totalorder %s11, 1
    %p83 = scmp.ne.s32.totalorder %s78, %s80
    %p84 = scmp.eq.s32.totalorder %s11, 0
    %p85 = por %p83, %p84
    %p86 = scmp.ne.s32.totalorder %s78, %s80
    %p87 = scmp.eq.s32.totalorder %s16, 1
    %p88 = por %p86, %p87
    %p89 = scmp.ne.s32.totalorder %s80, %s81
    %p90 = scmp.eq.s32.totalorder %s16, 0
    %p91 = por %p89, %p90
    %p92 = scmp.ne.s32.totalorder %s80, %s81
    %p93 = scmp.eq.s32.totalorder %s17, 1
    %p94 = por %p92, %p93
    %p96 = scmp.ne.s32.totalorder %s81, %s95
    %p97 = scmp.eq.s32.totalorder %s17, 0
    %p98 = por %p96, %p97
    %s99 = ssub.s32 %s18, %s30
    %s100 = ssub.s32 %s19, %s26
    %s101 = sor.u32 %s99, %s100
    %p102 = scmp.eq.s32.totalorder %s101, 0
    %s104 = sadd.s32 %s103, 1
    %s105 = scalar_select %p102, %s103, %s104
    %p108 = pneg %p102
    %p109 = scmp.eq.s32.totalorder %s11, 1
    %p110 = por %p108, %p109
    %p111 = scmp.ne.s32.totalorder %s103, %s106
    %p112 = scmp.eq.s32.totalorder %s11, 0
    %p113 = por %p111, %p112
    %p114 = scmp.ne.s32.totalorder %s103, %s106
    %p115 = scmp.eq.s32.totalorder %s16, 1
    %p116 = por %p114, %p115
    %p117 = scmp.ne.s32.totalorder %s106, %s107
    %p118 = scmp.eq.s32.totalorder %s16, 0
    %p119 = por %p117, %p118
    %p120 = scmp.ne.s32.totalorder %s106, %s107
    %p121 = scmp.eq.s32.totalorder %s17, 1
    %p122 = por %p120, %p121
    %p124 = scmp.ne.s32.totalorder %s107, %s123
    %p125 = scmp.eq.s32.totalorder %s17, 0
    %p126 = por %p124, %p125
    %s127 = ssub.s32 %s18, %s30
    %s128 = ssub.s32 %s19, %s26
    %s129 = sor.u32 %s127, %s128
    %p130 = scmp.eq.s32.totalorder %s129, 0
    %s132 = sadd.s32 %s131, 1
    %s133 = scalar_select %p130, %s131, %s132
    %p136 = pneg %p130
    %p137 = scmp.eq.s32.totalorder %s11, 1
    %p138 = por %p136, %p137
    %p139 = scmp.ne.s32.totalorder %s131, %s134
    %p140 = scmp.eq.s32.totalorder %s11, 0
    %p141 = por %p139, %p140
    %p142 = scmp.ne.s32.totalorder %s131, %s134
    %p143 = scmp.eq.s32.totalorder %s16, 1
    %p144 = por %p142, %p143
    %p145 = scmp.ne.s32.totalorder %s134, %s135
    %p146 = scmp.eq.s32.totalorder %s16, 0
    %p147 = por %p145, %p146
    %p148 = scmp.ne.s32.totalorder %s134, %s135
    %p149 = scmp.eq.s32.totalorder %s17, 1
    %p150 = por %p148, %p149
    %p152 = scmp.ne.s32.totalorder %s135, %s151
    %p153 = scmp.eq.s32.totalorder %s17, 0
    %p154 = por %p152, %p153
    %p155 = scmp.le.s32.totalorder 1, %s11
    %p156 = scmp.lt.s32.totalorder %s11, 3
    %p157 = pnand %p155, %p156
    %p158 = pneg %p157
    // Predicated region
    $region9: #{lightweight_conv2d.2} parent=5 // pred_check
      _
    $region10: #{lightweight_conv2d.2} parent=5 // pred_check_branch
      %160 = sbr.rel (%p157) target = $region12
    $region11: #{lightweight_conv2d.2} parent=5 // pred_region
      %s161 = ssub.s32 %s11, 1
      // Predicated region
      $region13: #{lightweight_conv2d.2} parent=11 // pred_check
        %p162 = pneg %p70
      $region14: #{lightweight_conv2d.2} parent=11 // pred_check_branch
        %164 = sbr.rel (%p162) target = $region16
      $region15: #{lightweight_conv2d.2} parent=11 // pred_region
        _
      $region16: #{lightweight_conv2d.2} parent=11 // pred_fallthru
        _
      // Predicated region
      $region17: #{lightweight_conv2d.2} parent=11 // pred_check
        %p165 = pneg %p91
      $region18: #{lightweight_conv2d.2} parent=11 // pred_check_branch
        %167 = sbr.rel (%p165) target = $region20
      $region19: #{lightweight_conv2d.2} parent=11 // pred_region
        _
      $region20: #{lightweight_conv2d.2} parent=11 // pred_fallthru
        _
    $region12: #{lightweight_conv2d.2} parent=5 // pred_fallthru
      _
    %p168 = scmp.lt.s32.totalorder %s11, 2
    // Predicated region
    $region21: #{lightweight_conv2d.2} parent=5 // pred_check
      %p169 = pneg %p168
    $region22: #{lightweight_conv2d.2} parent=5 // pred_check_branch
      %171 = sbr.rel (%p169) target = $region24
    $region23: #{lightweight_conv2d.2} parent=5 // pred_region
      // Predicated region
      $region25: #{lightweight_conv2d.2} parent=23 // pred_check
        %p172 = pneg %p43
      $region26: #{lightweight_conv2d.2} parent=23 // pred_check_branch
        %174 = sbr.rel (%p172) target = $region28
      $region27: #{lightweight_conv2d.2} parent=23 // pred_region
        %p175 = scmp.lt.s32.totalorder %s18, 1
        %s176 = scalar_select %p175, %s18, 1
        %s177 = smul.addr %s176, 6
        %s178 = smul.addr %s177, 4
        %s179 = scalar_lea.vmem %s0, %s178
      $region28: #{lightweight_conv2d.2} parent=23 // pred_fallthru
        _
    $region24: #{lightweight_conv2d.2} parent=5 // pred_fallthru
      _
    %p180 = scmp.le.s32.totalorder 1, %s11
    %p181 = scmp.lt.s32.totalorder %s11, 3
    %p182 = pnand %p180, %p181
    %p183 = pneg %p182
    // Predicated region
    $region29: #{lightweight_conv2d.2} parent=5 // pred_check
      _
    $region30: #{lightweight_conv2d.2} parent=5 // pred_check_branch
      %185 = sbr.rel (%p182) target = $region32
    $region31: #{lightweight_conv2d.2} parent=5 // pred_region
      %s186 = ssub.s32 %s11, 1
      %p187 = scmp.lt.s32.totalorder %s20, 1
      %s188 = scalar_select %p187, %s20, 1
      %s189 = smul.addr %s188, 6
      %s190 = smul.addr %s189, 4
      %s191 = scalar_lea.vmem %s0, %s190
      %p192 = pneg %p49
      %p193 = pneg %p46
      %p194 = pneg %p70
      %p195 = pneg %p67
      %p196 = pneg %p91
      %p197 = pneg %p88
      %p198 = pneg %p119
      %p199 = pneg %p116
      %p200 = scmp.lt.s32.totalorder %s20, 1
      %s201 = scalar_select %p200, %s20, 1
      %p202 = scmp.lt.s32.totalorder %s21, 0
      %s203 = scalar_select %p202, %s21, 0
      %s204 = smul.addr %s203, 3
      %s205 = smul.addr %s201, 3
      %s206 = sadd.s32 %s204, %s205
      %s207 = smul.addr %s206, 4
      %s208 = scalar_lea.vmem %s3, %s207
      %p209 = pneg %p147
      %p210 = pneg %p144
      %p211 = scmp.lt.s32.totalorder %s20, 1
      %s212 = scalar_select %p211, %s20, 1
      %p213 = scmp.lt.s32.totalorder %s21, 0
      %s214 = scalar_select %p213, %s21, 0
      %s215 = smul.addr %s214, 16
      %s216 = smul.addr %s212, 16
      %s217 = sadd.s32 %s215, %s216
      %s218 = smul.addr %s217, 8
      %s219 = scalar_lea.vmem %s4, %s218
      %p220 = scmp.lt.s32.totalorder %s20, 1
      %s221 = scalar_select %p220, %s20, 1
      %s222 = smul.addr %s221, 6
      %s223 = smul.addr %s222, 4
      %s224 = scalar_lea.vmem %s0, %s223
      %p225 = scmp.lt.s32.totalorder %s20, 1
      %s226 = scalar_select %p225, %s20, 1
      %p227 = scmp.lt.s32.totalorder %s21, 0
      %s228 = scalar_select %p227, %s21, 0
      %s229 = smul.addr %s228, 3
      %s230 = smul.addr %s226, 3
      %s231 = sadd.s32 %s229, %s230
      %s232 = smul.addr %s231, 4
      %s233 = scalar_lea.vmem %s3, %s232
      %p234 = scmp.lt.s32.totalorder %s20, 1
      %s235 = scalar_select %p234, %s20, 1
      %p236 = scmp.lt.s32.totalorder %s21, 0
      %s237 = scalar_select %p236, %s21, 0
      %s238 = smul.addr %s237, 16
      %s239 = smul.addr %s235, 16
      %s240 = sadd.s32 %s238, %s239
      %s241 = smul.addr %s240, 8
      %s242 = scalar_lea.vmem %s4, %s241
      %v244 = vld [vmem:[%s224] sm:$0xff]
      %v245 = vld [vmem:[%s224 + $0x8] sm:$0xf]
      %v246 = vld [vmem:[%s224 + $0xc] sm:$0xff]
      %v247 = vld [vmem:[%s224 + $0x14] sm:$0xf]
      %248 = vst [vmem:[#allocation2] sm:$0xff] %v244
      %vm249 = vcmask 257024
      %250 = vst.msk [vmem:[#allocation2 + $0x8] sm:$0xf] %vm249, %v245
      %251 = vst [vmem:[#allocation2 + $0xc] sm:$0xff] %v246
      %252 = vst.msk [vmem:[#allocation2 + $0x14] sm:$0xf] %vm249, %v247
      %v253 = vld [vmem:[%s224] sm:$0xff]
      %v254 = vld [vmem:[%s224 + $0x8] sm:$0xf]
      %v255 = vld [vmem:[%s224 + $0xc] sm:$0xff]
      %v256 = vld [vmem:[%s224 + $0x14] sm:$0xf]
      %261 = vrot.lane.b32.xlu0 %v253, 127
      %v262 = vpop.permute.xlu0 %261
      %263 = vrot.lane.b32.xlu0 %v254, 127
      %v264 = vpop.permute.xlu0 %263
      %265 = vrot.lane.b32.xlu0 %v255, 127
      %v266 = vpop.permute.xlu0 %265
      %267 = vrot.lane.b32.xlu0 %v256, 127
      %v268 = vpop.permute.xlu0 %267
      %v269 = vrot.slane %v262, 4
      %v270 = vrot.slane %v264, 4
      %v271 = vrot.slane %v266, 4
      %v272 = vrot.slane %v268, 4
      %vm273 = vcmask 1043456
      %v274 = vsel %vm273, %v269, %v270
      %vm275 = vcmask 1039360
      %v276 = vsel %vm275, %v262, %v274
      %v277 = vsel %vm273, %v271, %v272
      %v278 = vsel %vm275, %v266, %v277
      %283 = vst [vmem:[#allocation2 + $0x18] sm:$0xff] %v276
      %284 = vst.msk [vmem:[#allocation2 + $0x20] sm:$0xf] %vm249, %v264
      %285 = vst [vmem:[#allocation2 + $0x24] sm:$0xff] %v278
      %286 = vst.msk [vmem:[#allocation2 + $0x2c] sm:$0xf] %vm249, %v268
      %v287 = vld [vmem:[%s224] sm:$0xff]
      %v288 = vld [vmem:[%s224 + $0x8] sm:$0xf]
      %v289 = vld [vmem:[%s224 + $0xc] sm:$0xff]
      %v290 = vld [vmem:[%s224 + $0x14] sm:$0xf]
      %295 = vrot.lane.b32.xlu0 %v287, 126
      %v296 = vpop.permute.xlu0 %295
      %297 = vrot.lane.b32.xlu0 %v288, 126
      %v298 = vpop.permute.xlu0 %297
      %299 = vrot.lane.b32.xlu0 %v289, 126
      %v300 = vpop.permute.xlu0 %299
      %301 = vrot.lane.b32.xlu0 %v290, 126
      %v302 = vpop.permute.xlu0 %301
      %v303 = vrot.slane %v296, 4
      %v304 = vrot.slane %v298, 4
      %v305 = vrot.slane %v300, 4
      %v306 = vrot.slane %v302, 4
      %v307 = vsel %vm273, %v303, %v304
      %vm308 = vcmask 1031168
      %v309 = vsel %vm308, %v296, %v307
      %v310 = vsel %vm273, %v305, %v306
      %v311 = vsel %vm308, %v300, %v310
      %316 = vst [vmem:[#allocation2 + $0x30] sm:$0xff] %v309
      %317 = vst.msk [vmem:[#allocation2 + $0x38] sm:$0xf] %vm249, %v298
      %318 = vst [vmem:[#allocation2 + $0x3c] sm:$0xff] %v311
      %319 = vst.msk [vmem:[#allocation2 + $0x44] sm:$0xf] %vm249, %v302
      %v320 = vld [vmem:[%s224] sm:$0xff]
      %v321 = vld [vmem:[%s224 + $0x8] sm:$0xf]
      %v322 = vld [vmem:[%s224 + $0xc] sm:$0xff]
      %v323 = vld [vmem:[%s224 + $0x14] sm:$0xf]
      %328 = vrot.lane.b32.xlu0 %v320, 110
      %v329 = vpop.permute.xlu0 %328
      %330 = vrot.lane.b32.xlu0 %v321, 110
      %v331 = vpop.permute.xlu0 %330
      %332 = vrot.lane.b32.xlu0 %v322, 110
      %v333 = vpop.permute.xlu0 %332
      %334 = vrot.lane.b32.xlu0 %v323, 110
      %v335 = vpop.permute.xlu0 %334
      %v336 = vrot.slane %v329, 4
      %v337 = vrot.slane %v331, 4
      %v338 = vrot.slane %v333, 4
      %v339 = vrot.slane %v335, 4
      %v340 = vsel %vm273, %v336, %v337
      %vm341 = vcmask 900096
      %v342 = vsel %vm341, %v329, %v340
      %v343 = vsel %vm273, %v338, %v339
      %v344 = vsel %vm341, %v333, %v343
      %349 = vst [vmem:[#allocation2 + $0x48] sm:$0xff] %v342
      %350 = vst.msk [vmem:[#allocation2 + $0x50] sm:$0xf] %vm249, %v331
      %351 = vst [vmem:[#allocation2 + $0x54] sm:$0xff] %v344
      %352 = vst.msk [vmem:[#allocation2 + $0x5c] sm:$0xf] %vm249, %v335
      %v353 = vld [vmem:[%s224] sm:$0xff]
      %v354 = vld [vmem:[%s224 + $0x8] sm:$0xf]
      %v355 = vld [vmem:[%s224 + $0xc] sm:$0xff]
      %v356 = vld [vmem:[%s224 + $0x14] sm:$0xf]
      %361 = vrot.lane.b32.xlu0 %v353, 109
      %v362 = vpop.permute.xlu0 %361
      %363 = vrot.lane.b32.xlu0 %v354, 109
      %v364 = vpop.permute.xlu0 %363
      %365 = vrot.lane.b32.xlu0 %v355, 109
      %v366 = vpop.permute.xlu0 %365
      %367 = vrot.lane.b32.xlu0 %v356, 109
      %v368 = vpop.permute.xlu0 %367
      %v369 = vrot.slane %v362, 4
      %v370 = vrot.slane %v364, 4
      %v371 = vrot.slane %v366, 4
      %v372 = vrot.slane %v368, 4
      %v373 = vsel %vm273, %v369, %v370
      %vm374 = vcmask 891904
      %v375 = vsel %vm374, %v362, %v373
      %v376 = vsel %vm273, %v371, %v372
      %v377 = vsel %vm374, %v366, %v376
      %382 = vst [vmem:[#allocation2 + $0x60] sm:$0xff] %v375
      %383 = vst.msk [vmem:[#allocation2 + $0x68] sm:$0xf] %vm249, %v364
      %384 = vst [vmem:[#allocation2 + $0x6c] sm:$0xff] %v377
      %385 = vst.msk [vmem:[#allocation2 + $0x74] sm:$0xf] %vm249, %v368
      %v386 = vld [vmem:[%s224] sm:$0xff]
      %v387 = vld [vmem:[%s224 + $0x8] sm:$0xf]
      %v388 = vld [vmem:[%s224 + $0xc] sm:$0xff]
      %v389 = vld [vmem:[%s224 + $0x14] sm:$0xf]
      %394 = vrot.lane.b32.xlu0 %v386, 108
      %v395 = vpop.permute.xlu0 %394
      %396 = vrot.lane.b32.xlu0 %v387, 108
      %v397 = vpop.permute.xlu0 %396
      %398 = vrot.lane.b32.xlu0 %v388, 108
      %v399 = vpop.permute.xlu0 %398
      %400 = vrot.lane.b32.xlu0 %v389, 108
      %v401 = vpop.permute.xlu0 %400
      %v402 = vrot.slane %v395, 4
      %v403 = vrot.slane %v397, 4
      %v404 = vrot.slane %v399, 4
      %v405 = vrot.slane %v401, 4
      %v406 = vsel %vm273, %v402, %v403
      %vm407 = vcmask 883712
      %v408 = vsel %vm407, %v395, %v406
      %v409 = vsel %vm273, %v404, %v405
      %v410 = vsel %vm407, %v399, %v409
      %415 = vst [vmem:[#allocation2 + $0x78] sm:$0xff] %v408
      %416 = vst.msk [vmem:[#allocation2 + $0x80] sm:$0xf] %vm249, %v397
      %417 = vst [vmem:[#allocation2 + $0x84] sm:$0xff] %v410
      %418 = vst.msk [vmem:[#allocation2 + $0x8c] sm:$0xf] %vm249, %v401
      %v419 = vld [vmem:[%s224] sm:$0xff]
      %v420 = vld [vmem:[%s224 + $0x8] sm:$0xf]
      %v421 = vld [vmem:[%s224 + $0xc] sm:$0xff]
      %v422 = vld [vmem:[%s224 + $0x14] sm:$0xf]
      %427 = vrot.lane.b32.xlu0 %v419, 92
      %v428 = vpop.permute.xlu0 %427
      %429 = vrot.lane.b32.xlu0 %v420, 92
      %v430 = vpop.permute.xlu0 %429
      %431 = vrot.lane.b32.xlu0 %v421, 92
      %v432 = vpop.permute.xlu0 %431
      %433 = vrot.lane.b32.xlu0 %v422, 92
      %v434 = vpop.permute.xlu0 %433
      %v435 = vrot.slane %v428, 4
      %v436 = vrot.slane %v430, 4
      %v437 = vrot.slane %v432, 4
      %v438 = vrot.slane %v434, 4
      %v439 = vsel %vm273, %v435, %v436
      %vm440 = vcmask 752640
      %v441 = vsel %vm440, %v428, %v439
      %v442 = vsel %vm273, %v437, %v438
      %v443 = vsel %vm440, %v432, %v442
      %448 = vst [vmem:[#allocation2 + $0x90] sm:$0xff] %v441
      %449 = vst.msk [vmem:[#allocation2 + $0x98] sm:$0xf] %vm249, %v430
      %450 = vst [vmem:[#allocation2 + $0x9c] sm:$0xff] %v443
      %451 = vst.msk [vmem:[#allocation2 + $0xa4] sm:$0xf] %vm249, %v434
      %v452 = vld [vmem:[%s224] sm:$0xff]
      %v453 = vld [vmem:[%s224 + $0x8] sm:$0xf]
      %v454 = vld [vmem:[%s224 + $0xc] sm:$0xff]
      %v455 = vld [vmem:[%s224 + $0x14] sm:$0xf]
      %460 = vrot.lane.b32.xlu0 %v452, 91
      %v461 = vpop.permute.xlu0 %460
      %462 = vrot.lane.b32.xlu0 %v453, 91
      %v463 = vpop.permute.xlu0 %462
      %464 = vrot.lane.b32.xlu0 %v454, 91
      %v465 = vpop.permute.xlu0 %464
      %466 = vrot.lane.b32.xlu0 %v455, 91
      %v467 = vpop.permute.xlu0 %466
      %v468 = vrot.slane %v461, 4
      %v469 = vrot.slane %v463, 4
      %v470 = vrot.slane %v465, 4
      %v471 = vrot.slane %v467, 4
      %v472 = vsel %vm273, %v468, %v469
      %vm473 = vcmask 744448
      %v474 = vsel %vm473, %v461, %v472
      %v475 = vsel %vm273, %v470, %v471
      %v476 = vsel %vm473, %v465, %v475
      %481 = vst [vmem:[#allocation2 + $0xa8] sm:$0xff] %v474
      %482 = vst.msk [vmem:[#allocation2 + $0xb0] sm:$0xf] %vm249, %v463
      %483 = vst [vmem:[#allocation2 + $0xb4] sm:$0xff] %v476
      %484 = vst.msk [vmem:[#allocation2 + $0xbc] sm:$0xf] %vm249, %v467
      %v485 = vld [vmem:[%s224] sm:$0xff]
      %v486 = vld [vmem:[%s224 + $0x8] sm:$0xf]
      %v487 = vld [vmem:[%s224 + $0xc] sm:$0xff]
      %v488 = vld [vmem:[%s224 + $0x14] sm:$0xf]
      %493 = vrot.lane.b32.xlu0 %v485, 90
      %v494 = vpop.permute.xlu0 %493
      %495 = vrot.lane.b32.xlu0 %v486, 90
      %v496 = vpop.permute.xlu0 %495
      %497 = vrot.lane.b32.xlu0 %v487, 90
      %v498 = vpop.permute.xlu0 %497
      %499 = vrot.lane.b32.xlu0 %v488, 90
      %v500 = vpop.permute.xlu0 %499
      %v501 = vrot.slane %v494, 4
      %v502 = vrot.slane %v496, 4
      %v503 = vrot.slane %v498, 4
      %v504 = vrot.slane %v500, 4
      %v505 = vsel %vm273, %v501, %v502
      %vm506 = vcmask 736256
      %v507 = vsel %vm506, %v494, %v505
      %v508 = vsel %vm273, %v503, %v504
      %v509 = vsel %vm506, %v498, %v508
      %514 = vst [vmem:[#allocation2 + $0xc0] sm:$0xff] %v507
      %515 = vst.msk [vmem:[#allocation2 + $0xc8] sm:$0xf] %vm249, %v496
      %516 = vst [vmem:[#allocation2 + $0xcc] sm:$0xff] %v509
      %517 = vst.msk [vmem:[#allocation2 + $0xd4] sm:$0xf] %vm249, %v500
      %v518 = vld [vmem:[%s1] sm:$0xff]
      %v519 = vld [vmem:[%s1 + $0x8] sm:$0xff]
      %v520 = vld [vmem:[%s1 + $0x10] sm:$0xff]
      %v521 = vld [vmem:[%s1 + $0x18] sm:$0xff]
      %v522 = vld [vmem:[%s1 + $0x20] sm:$0xff]
      %v523 = vld [vmem:[%s1 + $0x28] sm:$0xff]
      %v524 = vld [vmem:[%s1 + $0x30] sm:$0xff]
      %v525 = vld [vmem:[%s1 + $0x38] sm:$0xff]
      %v526 = vld [vmem:[%s1 + $0x40] sm:$0xff]
      %v527 = vld [vmem:[%s1 + $0x48] sm:$0xff]
      %v528 = vld [vmem:[%s1 + $0x50] sm:$0xff]
      %v529 = vld [vmem:[%s1 + $0x58] sm:$0xff]
      %v530 = vld [vmem:[%s1 + $0x60] sm:$0xff]
      %v531 = vld [vmem:[%s1 + $0x68] sm:$0xff]
      %v532 = vld [vmem:[%s1 + $0x70] sm:$0xff]
      %v533 = vld [vmem:[%s1 + $0x78] sm:$0xff]
      %v534 = vld [vmem:[#allocation2] sm:$0xff]
      %v535 = vld [vmem:[#allocation2 + $0x8] sm:$0xf]
      %v536 = vld [vmem:[#allocation2 + $0xc] sm:$0xff]
      %v537 = vld [vmem:[#allocation2 + $0x14] sm:$0xf]
      %v538 = vld [vmem:[#allocation2 + $0x18] sm:$0xff]
      %v539 = vld [vmem:[#allocation2 + $0x20] sm:$0xf]
      %v540 = vld [vmem:[#allocation2 + $0x24] sm:$0xff]
      %v541 = vld [vmem:[#allocation2 + $0x2c] sm:$0xf]
      %v542 = vld [vmem:[#allocation2 + $0x30] sm:$0xff]
      %v543 = vld [vmem:[#allocation2 + $0x38] sm:$0xf]
      %v544 = vld [vmem:[#allocation2 + $0x3c] sm:$0xff]
      %v545 = vld [vmem:[#allocation2 + $0x44] sm:$0xf]
      %v546 = vld [vmem:[#allocation2 + $0x48] sm:$0xff]
      %v547 = vld [vmem:[#allocation2 + $0x50] sm:$0xf]
      %v548 = vld [vmem:[#allocation2 + $0x54] sm:$0xff]
      %v549 = vld [vmem:[#allocation2 + $0x5c] sm:$0xf]
      %v550 = vld [vmem:[#allocation2 + $0x60] sm:$0xff]
      %v551 = vld [vmem:[#allocation2 + $0x68] sm:$0xf]
      %v552 = vld [vmem:[#allocation2 + $0x6c] sm:$0xff]
      %v553 = vld [vmem:[#allocation2 + $0x74] sm:$0xf]
      %v554 = vld [vmem:[#allocation2 + $0x78] sm:$0xff]
      %v555 = vld [vmem:[#allocation2 + $0x80] sm:$0xf]
      %v556 = vld [vmem:[#allocation2 + $0x84] sm:$0xff]
      %v557 = vld [vmem:[#allocation2 + $0x8c] sm:$0xf]
      %v558 = vld [vmem:[#allocation2 + $0x90] sm:$0xff]
      %v559 = vld [vmem:[#allocation2 + $0x98] sm:$0xf]
      %v560 = vld [vmem:[#allocation2 + $0x9c] sm:$0xff]
      %v561 = vld [vmem:[#allocation2 + $0xa4] sm:$0xf]
      %v562 = vld [vmem:[#allocation2 + $0xa8] sm:$0xff]
      %v563 = vld [vmem:[#allocation2 + $0xb0] sm:$0xf]
      %v564 = vld [vmem:[#allocation2 + $0xb4] sm:$0xff]
      %v565 = vld [vmem:[#allocation2 + $0xbc] sm:$0xf]
      %v566 = vld [vmem:[#allocation2 + $0xc0] sm:$0xff]
      %v567 = vld [vmem:[#allocation2 + $0xc8] sm:$0xf]
      %v568 = vld [vmem:[#allocation2 + $0xcc] sm:$0xff]
      %v569 = vld [vmem:[#allocation2 + $0xd4] sm:$0xf]
      %v586 = vunpack.c.l.b16 %v518
      %v587 = vunpack.c.h.b16 %v518
      %v588 = vunpack.c.l.b16 %v519
      %v589 = vunpack.c.h.b16 %v519
      %v590 = vunpack.c.l.b16 %v520
      %v591 = vunpack.c.h.b16 %v520
      %v592 = vunpack.c.l.b16 %v521
      %v593 = vunpack.c.h.b16 %v521
      %v594 = vunpack.c.l.b16 %v522
      %v595 = vunpack.c.h.b16 %v522
      %v596 = vunpack.c.l.b16 %v523
      %v597 = vunpack.c.h.b16 %v523
      %v598 = vunpack.c.l.b16 %v524
      %v599 = vunpack.c.h.b16 %v524
      %v600 = vunpack.c.l.b16 %v525
      %v601 = vunpack.c.h.b16 %v525
      %v602 = vunpack.c.l.b16 %v526
      %v603 = vunpack.c.h.b16 %v526
      %v604 = vunpack.c.l.b16 %v527
      %v605 = vunpack.c.h.b16 %v527
      %v606 = vunpack.c.l.b16 %v528
      %v607 = vunpack.c.h.b16 %v528
      %v608 = vunpack.c.l.b16 %v529
      %v609 = vunpack.c.h.b16 %v529
      %v610 = vunpack.c.l.b16 %v530
      %v611 = vunpack.c.h.b16 %v530
      %v612 = vunpack.c.l.b16 %v531
      %v613 = vunpack.c.h.b16 %v531
      %v614 = vunpack.c.l.b16 %v532
      %v615 = vunpack.c.h.b16 %v532
      %v616 = vunpack.c.l.b16 %v533
      %v617 = vunpack.c.h.b16 %v533
      %v618 = vpack.c.b16 %v588, %v586
      %v619 = vpack.c.b16 %v589, %v587
      %v620 = vpack.c.b16 %v592, %v590
      %v621 = vpack.c.b16 %v593, %v591
      %v622 = vpack.c.b16 %v596, %v594
      %v623 = vpack.c.b16 %v597, %v595
      %v624 = vpack.c.b16 %v600, %v598
      %v625 = vpack.c.b16 %v601, %v599
      %v626 = vpack.c.b16 %v604, %v602
      %v627 = vpack.c.b16 %v605, %v603
      %v628 = vpack.c.b16 %v608, %v606
      %v629 = vpack.c.b16 %v609, %v607
      %v630 = vpack.c.b16 %v612, %v610
      %v631 = vpack.c.b16 %v613, %v611
      %v632 = vpack.c.b16 %v616, %v614
      %v633 = vpack.c.b16 %v617, %v615
      %v678 = vunpack.c.l.b16 %v534
      %v679 = vunpack.c.h.b16 %v534
      %v680 = vunpack.c.l.b16 %v535
      %v681 = vunpack.c.l.b16 %v536
      %v682 = vunpack.c.h.b16 %v536
      %v683 = vunpack.c.l.b16 %v537
      %v684 = vunpack.c.l.b16 %v538
      %v685 = vunpack.c.h.b16 %v538
      %v686 = vunpack.c.l.b16 %v539
      %v687 = vunpack.c.l.b16 %v540
      %v688 = vunpack.c.h.b16 %v540
      %v689 = vunpack.c.l.b16 %v541
      %v690 = vunpack.c.l.b16 %v542
      %v691 = vunpack.c.h.b16 %v542
      %v692 = vunpack.c.l.b16 %v543
      %v693 = vunpack.c.l.b16 %v544
      %v694 = vunpack.c.h.b16 %v544
      %v695 = vunpack.c.l.b16 %v545
      %v696 = vunpack.c.l.b16 %v546
      %v697 = vunpack.c.h.b16 %v546
      %v698 = vunpack.c.l.b16 %v547
      %v699 = vunpack.c.l.b16 %v548
      %v700 = vunpack.c.h.b16 %v548
      %v701 = vunpack.c.l.b16 %v549
      %v702 = vunpack.c.l.b16 %v550
      %v703 = vunpack.c.h.b16 %v550
      %v704 = vunpack.c.l.b16 %v551
      %v705 = vunpack.c.l.b16 %v552
      %v706 = vunpack.c.h.b16 %v552
      %v707 = vunpack.c.l.b16 %v553
      %v708 = vunpack.c.l.b16 %v554
      %v709 = vunpack.c.h.b16 %v554
      %v710 = vunpack.c.l.b16 %v555
      %v711 = vunpack.c.l.b16 %v556
      %v712 = vunpack.c.h.b16 %v556
      %v713 = vunpack.c.l.b16 %v557
      %v714 = vunpack.c.l.b16 %v558
      %v715 = vunpack.c.h.b16 %v558
      %v716 = vunpack.c.l.b16 %v559
      %v717 = vunpack.c.l.b16 %v560
      %v718 = vunpack.c.h.b16 %v560
      %v719 = vunpack.c.l.b16 %v561
      %v720 = vunpack.c.l.b16 %v562
      %v721 = vunpack.c.h.b16 %v562
      %v722 = vunpack.c.l.b16 %v563
      %v723 = vunpack.c.l.b16 %v564
      %v724 = vunpack.c.h.b16 %v564
      %v725 = vunpack.c.l.b16 %v565
      %v726 = vunpack.c.l.b16 %v566
      %v727 = vunpack.c.h.b16 %v566
      %v728 = vunpack.c.l.b16 %v567
      %v729 = vunpack.c.l.b16 %v568
      %v730 = vunpack.c.h.b16 %v568
      %v731 = vunpack.c.l.b16 %v569
      %v732 = vpack.c.b16 %v681, %v678
      %v733 = vpack.c.b16 %v682, %v679
      %v734 = vpack.c.b16 %v683, %v680
      %v735 = vpack.c.b16 %v687, %v684
      %v736 = vpack.c.b16 %v688, %v685
      %v737 = vpack.c.b16 %v689, %v686
      %v738 = vpack.c.b16 %v693, %v690
      %v739 = vpack.c.b16 %v694, %v691
      %v740 = vpack.c.b16 %v695, %v692
      %v741 = vpack.c.b16 %v699, %v696
      %v742 = vpack.c.b16 %v700, %v697
      %v743 = vpack.c.b16 %v701, %v698
      %v744 = vpack.c.b16 %v705, %v702
      %v745 = vpack.c.b16 %v706, %v703
      %v746 = vpack.c.b16 %v707, %v704
      %v747 = vpack.c.b16 %v711, %v708
      %v748 = vpack.c.b16 %v712, %v709
      %v749 = vpack.c.b16 %v713, %v710
      %v750 = vpack.c.b16 %v717, %v714
      %v751 = vpack.c.b16 %v718, %v715
      %v752 = vpack.c.b16 %v719, %v716
      %v753 = vpack.c.b16 %v723, %v720
      %v754 = vpack.c.b16 %v724, %v721
      %v755 = vpack.c.b16 %v725, %v722
      %v756 = vpack.c.b16 %v729, %v726
      %v757 = vpack.c.b16 %v730, %v727
      %v758 = vpack.c.b16 %v731, %v728
      %vm786 = vcmask 130048
      %v788 = vsel %vm786, %v619, 0
      %v791 = vsel %vm786, %v621, 0
      %v794 = vsel %vm786, %v623, 0
      %v797 = vsel %vm786, %v625, 0
      %v800 = vsel %vm786, %v627, 0
      %v803 = vsel %vm786, %v629, 0
      %v806 = vsel %vm786, %v631, 0
      %v809 = vsel %vm786, %v633, 0
      %811 = vmatprep.subr.bf16.mxu0 %v754
      %812 = vmatpush1.bf16.msra.mxu0 %v753
      %813 = vmatprep.subr.bf16.mxu0 %v751
      %814 = vmatpush1.bf16.msra.mxu0 %v750
      %815 = vmatprep.subr.bf16.mxu0 %v748
      %816 = vmatpush1.bf16.msra.mxu0 %v747
      %817 = vmatprep.subr.bf16.mxu0 %v745
      %818 = vmatpush1.bf16.msra.mxu0 %v744
      %819 = vmatprep.subr.bf16.mxu0 %v742
      %820 = vmatpush1.bf16.msra.mxu0 %v741
      %821 = vmatprep.subr.bf16.mxu0 %v739
      %822 = vmatpush1.bf16.msra.mxu0 %v738
      %823 = vmatprep.subr.bf16.mxu0 %v736
      %824 = vmatpush1.bf16.msra.mxu0 %v735
      %825 = vmatprep.subr.bf16.mxu0 %v733
      %826 = vmatpush1.bf16.msra.mxu0 %v732
      %827 = vmatprep.subr.bf16.mxu0 0
      %828 = vmatpush2.bf16.msra.mxu0 0
      %829 = vmatprep.subr.bf16.mxu0 0
      %830 = vmatpush2.bf16.msra.mxu0 0
      %831 = vmatprep.subr.bf16.mxu0 0
      %832 = vmatpush2.bf16.msra.mxu0 0
      %833 = vmatprep.subr.bf16.mxu0 0
      %834 = vmatpush2.bf16.msra.mxu0 0
      %835 = vmatprep.subr.bf16.mxu0 0
      %836 = vmatpush2.bf16.msra.mxu0 0
      %837 = vmatprep.subr.bf16.mxu0 0
      %838 = vmatpush2.bf16.msra.mxu0 0
      %839 = vmatprep.subr.bf16.mxu0 0
      %840 = vmatpush2.bf16.msra.mxu0 0
      %841 = vmatprep.subr.bf16.mxu0 %v757
      %842 = vmatpush2.bf16.msra.mxu0 %v756
      %843 = vmatprep.mubr.bf16.mxu0 %v788
      %844 = vmatmul.mubr.bf16.gmra.mxu0 %v618
      %v845 = vpop.f32.mrf.mxu0
      %v846 = vadd.f32 0.0, %v845
      %v847 = vpop.f32.mrf.mxu0
      %v848 = vadd.f32 0.0, %v847
      %v849 = vpop.f32.mrf.mxu0
      %v850 = vadd.f32 0.0, %v849
      %v851 = vpop.f32.mrf.mxu0
      %v852 = vadd.f32 0.0, %v851
      %853 = vmatprep.mubr.bf16.mxu0 %v791
      %854 = vmatmul.mubr.bf16.gmra.mxu0 %v620
      %v855 = vpop.f32.mrf.mxu0
      %v856 = vadd.f32 0.0, %v855
      %v857 = vpop.f32.mrf.mxu0
      %v858 = vadd.f32 0.0, %v857
      %v859 = vpop.f32.mrf.mxu0
      %v860 = vadd.f32 0.0, %v859
      %v861 = vpop.f32.mrf.mxu0
      %v862 = vadd.f32 0.0, %v861
      %863 = vmatprep.mubr.bf16.mxu0 %v794
      %864 = vmatmul.mubr.bf16.gmra.mxu0 %v622
      %v865 = vpop.f32.mrf.mxu0
      %v866 = vadd.f32 0.0, %v865
      %v867 = vpop.f32.mrf.mxu0
      %v868 = vadd.f32 0.0, %v867
      %v869 = vpop.f32.mrf.mxu0
      %v870 = vadd.f32 0.0, %v869
      %v871 = vpop.f32.mrf.mxu0
      %v872 = vadd.f32 0.0, %v871
      %873 = vmatprep.mubr.bf16.mxu0 %v797
      %874 = vmatmul.mubr.bf16.gmra.mxu0 %v624
      %v875 = vpop.f32.mrf.mxu0
      %v876 = vadd.f32 0.0, %v875
      %v877 = vpop.f32.mrf.mxu0
      %v878 = vadd.f32 0.0, %v877
      %v879 = vpop.f32.mrf.mxu0
      %v880 = vadd.f32 0.0, %v879
      %v881 = vpop.f32.mrf.mxu0
      %v882 = vadd.f32 0.0, %v881
      %883 = vmatprep.mubr.bf16.mxu0 %v800
      %884 = vmatmul.mubr.bf16.gmra.mxu0 %v626
      %v885 = vpop.f32.mrf.mxu0
      %v886 = vadd.f32 0.0, %v885
      %v887 = vpop.f32.mrf.mxu0
      %v888 = vadd.f32 0.0, %v887
      %v889 = vpop.f32.mrf.mxu0
      %v890 = vadd.f32 0.0, %v889
      %v891 = vpop.f32.mrf.mxu0
      %v892 = vadd.f32 0.0, %v891
      %893 = vmatprep.mubr.bf16.mxu0 %v803
      %894 = vmatmul.mubr.bf16.gmra.mxu0 %v628
      %v895 = vpop.f32.mrf.mxu0
      %v896 = vadd.f32 0.0, %v895
      %v897 = vpop.f32.mrf.mxu0
      %v898 = vadd.f32 0.0, %v897
      %v899 = vpop.f32.mrf.mxu0
      %v900 = vadd.f32 0.0, %v899
      %v901 = vpop.f32.mrf.mxu0
      %v902 = vadd.f32 0.0, %v901
      %903 = vmatprep.mubr.bf16.mxu0 %v806
      %904 = vmatmul.mubr.bf16.gmra.mxu0 %v630
      %v905 = vpop.f32.mrf.mxu0
      %v906 = vadd.f32 0.0, %v905
      %v907 = vpop.f32.mrf.mxu0
      %v908 = vadd.f32 0.0, %v907
      %v909 = vpop.f32.mrf.mxu0
      %v910 = vadd.f32 0.0, %v909
      %v911 = vpop.f32.mrf.mxu0
      %v912 = vadd.f32 0.0, %v911
      %913 = vmatprep.mubr.bf16.mxu0 %v809
      %914 = vmatmul.mubr.bf16.gmra.mxu0 %v632
      %v915 = vpop.f32.mrf.mxu0
      %v916 = vadd.f32 0.0, %v915
      %v917 = vpop.f32.mrf.mxu0
      %v918 = vadd.f32 0.0, %v917
      %v919 = vpop.f32.mrf.mxu0
      %v920 = vadd.f32 0.0, %v919
      %v921 = vpop.f32.mrf.mxu0
      %v922 = vadd.f32 0.0, %v921
      %923 = vdwg.mxu0
      %924 = vmatprep.subr.bf16.mxu0 0
      %925 = vmatpush1.bf16.msra.mxu0 %v755
      %926 = vmatprep.subr.bf16.mxu0 0
      %927 = vmatpush1.bf16.msra.mxu0 %v752
      %928 = vmatprep.subr.bf16.mxu0 0
      %929 = vmatpush1.bf16.msra.mxu0 %v749
      %930 = vmatprep.subr.bf16.mxu0 0
      %931 = vmatpush1.bf16.msra.mxu0 %v746
      %932 = vmatprep.subr.bf16.mxu0 0
      %933 = vmatpush1.bf16.msra.mxu0 %v743
      %934 = vmatprep.subr.bf16.mxu0 0
      %935 = vmatpush1.bf16.msra.mxu0 %v740
      %936 = vmatprep.subr.bf16.mxu0 0
      %937 = vmatpush1.bf16.msra.mxu0 %v737
      %938 = vmatprep.subr.bf16.mxu0 0
      %939 = vmatpush1.bf16.msra.mxu0 %v734
      %940 = vmatprep.subr.bf16.mxu0 0
      %941 = vmatpush2.bf16.msra.mxu0 0
      %942 = vmatprep.subr.bf16.mxu0 0
      %943 = vmatpush2.bf16.msra.mxu0 0
      %944 = vmatprep.subr.bf16.mxu0 0
      %945 = vmatpush2.bf16.msra.mxu0 0
      %946 = vmatprep.subr.bf16.mxu0 0
      %947 = vmatpush2.bf16.msra.mxu0 0
      %948 = vmatprep.subr.bf16.mxu0 0
      %949 = vmatpush2.bf16.msra.mxu0 0
      %950 = vmatprep.subr.bf16.mxu0 0
      %951 = vmatpush2.bf16.msra.mxu0 0
      %952 = vmatprep.subr.bf16.mxu0 0
      %953 = vmatpush2.bf16.msra.mxu0 0
      %954 = vmatprep.subr.bf16.mxu0 0
      %955 = vmatpush2.bf16.msra.mxu0 %v758
      %956 = vmatprep.mubr.bf16.mxu0 %v788
      %957 = vmatmul.mubr.bf16.gmra.mxu0 %v618
      %v958 = vpop.f32.mrf.mxu0
      %v959 = vadd.f32 0.0, %v958
      %v960 = vpop.f32.mrf.mxu0
      %v961 = vpop.f32.mrf.mxu0
      %v962 = vadd.f32 0.0, %v961
      %v963 = vpop.f32.mrf.mxu0
      %964 = vmatprep.mubr.bf16.mxu0 %v791
      %965 = vmatmul.mubr.bf16.gmra.mxu0 %v620
      %v966 = vpop.f32.mrf.mxu0
      %v967 = vadd.f32 0.0, %v966
      %v968 = vpop.f32.mrf.mxu0
      %v969 = vpop.f32.mrf.mxu0
      %v970 = vadd.f32 0.0, %v969
      %v971 = vpop.f32.mrf.mxu0
      %972 = vmatprep.mubr.bf16.mxu0 %v794
      %973 = vmatmul.mubr.bf16.gmra.mxu0 %v622
      %v974 = vpop.f32.mrf.mxu0
      %v975 = vadd.f32 0.0, %v974
      %v976 = vpop.f32.mrf.mxu0
      %v977 = vpop.f32.mrf.mxu0
      %v978 = vadd.f32 0.0, %v977
      %v979 = vpop.f32.mrf.mxu0
      %980 = vmatprep.mubr.bf16.mxu0 %v797
      %981 = vmatmul.mubr.bf16.gmra.mxu0 %v624
      %v982 = vpop.f32.mrf.mxu0
      %v983 = vadd.f32 0.0, %v982
      %v984 = vpop.f32.mrf.mxu0
      %v985 = vpop.f32.mrf.mxu0
      %v986 = vadd.f32 0.0, %v985
      %v987 = vpop.f32.mrf.mxu0
      %988 = vmatprep.mubr.bf16.mxu0 %v800
      %989 = vmatmul.mubr.bf16.gmra.mxu0 %v626
      %v990 = vpop.f32.mrf.mxu0
      %v991 = vadd.f32 0.0, %v990
      %v992 = vpop.f32.mrf.mxu0
      %v993 = vpop.f32.mrf.mxu0
      %v994 = vadd.f32 0.0, %v993
      %v995 = vpop.f32.mrf.mxu0
      %996 = vmatprep.mubr.bf16.mxu0 %v803
      %997 = vmatmul.mubr.bf16.gmra.mxu0 %v628
      %v998 = vpop.f32.mrf.mxu0
      %v999 = vadd.f32 0.0, %v998
      %v1000 = vpop.f32.mrf.mxu0
      %v1001 = vpop.f32.mrf.mxu0
      %v1002 = vadd.f32 0.0, %v1001
      %v1003 = vpop.f32.mrf.mxu0
      %1004 = vmatprep.mubr.bf16.mxu0 %v806
      %1005 = vmatmul.mubr.bf16.gmra.mxu0 %v630
      %v1006 = vpop.f32.mrf.mxu0
      %v1007 = vadd.f32 0.0, %v1006
      %v1008 = vpop.f32.mrf.mxu0
      %v1009 = vpop.f32.mrf.mxu0
      %v1010 = vadd.f32 0.0, %v1009
      %v1011 = vpop.f32.mrf.mxu0
      %1012 = vmatprep.mubr.bf16.mxu0 %v809
      %1013 = vmatmul.mubr.bf16.gmra.mxu0 %v632
      %v1014 = vpop.f32.mrf.mxu0
      %v1015 = vadd.f32 0.0, %v1014
      %v1016 = vpop.f32.mrf.mxu0
      %v1017 = vpop.f32.mrf.mxu0
      %v1018 = vadd.f32 0.0, %v1017
      %v1019 = vpop.f32.mrf.mxu0
      %1020 = vdwg.mxu0
      %v1021 = vld [vmem:[%s2] sm:$0x7]
      %v1023 = vlaneseq
      %v1024 = vshrl.u32 %v1023, 7
      %v1025 = vsub.s32 0, %v1024
      %v1026 = vrot.slane %v1021, %v1025
      %v1027 = vlaneseq
      %v1028 = vshrl.u32 %v1027, 7
      %v1029 = vsub.s32 1, %v1028
      %v1030 = vrot.slane %v1021, %v1029
      %v1031 = vlaneseq
      %v1032 = vshrl.u32 %v1031, 7
      %v1033 = vsub.s32 2, %v1032
      %v1034 = vrot.slane %v1021, %v1033
      %v1038 = vmul.f32 %v846, %v1026
      %v1039 = vmul.f32 %v848, %v1030
      %v1040 = vmul.f32 %v959, %v1034
      %v1041 = vmul.f32 %v850, %v1026
      %v1042 = vmul.f32 %v852, %v1030
      %v1043 = vmul.f32 %v962, %v1034
      %v1044 = vmul.f32 %v856, %v1026
      %v1045 = vmul.f32 %v858, %v1030
      %v1046 = vmul.f32 %v967, %v1034
      %v1047 = vmul.f32 %v860, %v1026
      %v1048 = vmul.f32 %v862, %v1030
      %v1049 = vmul.f32 %v970, %v1034
      %v1050 = vmul.f32 %v866, %v1026
      %v1051 = vmul.f32 %v868, %v1030
      %v1052 = vmul.f32 %v975, %v1034
      %v1053 = vmul.f32 %v870, %v1026
      %v1054 = vmul.f32 %v872, %v1030
      %v1055 = vmul.f32 %v978, %v1034
      %v1056 = vmul.f32 %v876, %v1026
      %v1057 = vmul.f32 %v878, %v1030
      %v1058 = vmul.f32 %v983, %v1034
      %v1059 = vmul.f32 %v880, %v1026
      %v1060 = vmul.f32 %v882, %v1030
      %v1061 = vmul.f32 %v986, %v1034
      %v1062 = vmul.f32 %v886, %v1026
      %v1063 = vmul.f32 %v888, %v1030
      %v1064 = vmul.f32 %v991, %v1034
      %v1065 = vmul.f32 %v890, %v1026
      %v1066 = vmul.f32 %v892, %v1030
      %v1067 = vmul.f32 %v994, %v1034
      %v1068 = vmul.f32 %v896, %v1026
      %v1069 = vmul.f32 %v898, %v1030
      %v1070 = vmul.f32 %v999, %v1034
      %v1071 = vmul.f32 %v900, %v1026
      %v1072 = vmul.f32 %v902, %v1030
      %v1073 = vmul.f32 %v1002, %v1034
      %v1074 = vmul.f32 %v906, %v1026
      %v1075 = vmul.f32 %v908, %v1030
      %v1076 = vmul.f32 %v1007, %v1034
      %v1077 = vmul.f32 %v910, %v1026
      %v1078 = vmul.f32 %v912, %v1030
      %v1079 = vmul.f32 %v1010, %v1034
      %v1080 = vmul.f32 %v916, %v1026
      %v1081 = vmul.f32 %v918, %v1030
      %v1082 = vmul.f32 %v1015, %v1034
      %v1083 = vmul.f32 %v920, %v1026
      %v1084 = vmul.f32 %v922, %v1030
      %v1085 = vmul.f32 %v1018, %v1034
      %v1086 = vadd.f32 %v1038, %v1039
      %vm1087 = vcmask 261120
      %v1088 = vsel %vm1087, %v1040, 0.0
      %v1089 = vadd.f32 %v1086, %v1088
      %1090 = vadd.xlane.f32.xlu0 %v1089
      %v1091 = vpop.xlane.xlu0 %1090
      %v1092 = vadd.f32 %v1041, %v1042
      %v1093 = vsel %vm1087, %v1043, 0.0
      %v1094 = vadd.f32 %v1092, %v1093
      %1095 = vadd.xlane.f32.xlu0 %v1094
      %v1096 = vpop.xlane.xlu0 %1095
      %v1097 = vadd.f32 %v1044, %v1045
      %v1098 = vsel %vm1087, %v1046, 0.0
      %v1099 = vadd.f32 %v1097, %v1098
      %1100 = vadd.xlane.f32.xlu0 %v1099
      %v1101 = vpop.xlane.xlu0 %1100
      %v1102 = vadd.f32 %v1047, %v1048
      %v1103 = vsel %vm1087, %v1049, 0.0
      %v1104 = vadd.f32 %v1102, %v1103
      %1105 = vadd.xlane.f32.xlu0 %v1104
      %v1106 = vpop.xlane.xlu0 %1105
      %v1107 = vadd.f32 %v1050, %v1051
      %v1108 = vsel %vm1087, %v1052, 0.0
      %v1109 = vadd.f32 %v1107, %v1108
      %1110 = vadd.xlane.f32.xlu0 %v1109
      %v1111 = vpop.xlane.xlu0 %1110
      %v1112 = vadd.f32 %v1053, %v1054
      %v1113 = vsel %vm1087, %v1055, 0.0
      %v1114 = vadd.f32 %v1112, %v1113
      %1115 = vadd.xlane.f32.xlu0 %v1114
      %v1116 = vpop.xlane.xlu0 %1115
      %v1117 = vadd.f32 %v1056, %v1057
      %v1118 = vsel %vm1087, %v1058, 0.0
      %v1119 = vadd.f32 %v1117, %v1118
      %1120 = vadd.xlane.f32.xlu0 %v1119
      %v1121 = vpop.xlane.xlu0 %1120
      %v1122 = vadd.f32 %v1059, %v1060
      %v1123 = vsel %vm1087, %v1061, 0.0
      %v1124 = vadd.f32 %v1122, %v1123
      %1125 = vadd.xlane.f32.xlu0 %v1124
      %v1126 = vpop.xlane.xlu0 %1125
      %v1127 = vadd.f32 %v1062, %v1063
      %v1128 = vsel %vm1087, %v1064, 0.0
      %v1129 = vadd.f32 %v1127, %v1128
      %1130 = vadd.xlane.f32.xlu0 %v1129
      %v1131 = vpop.xlane.xlu0 %1130
      %v1132 = vadd.f32 %v1065, %v1066
      %v1133 = vsel %vm1087, %v1067, 0.0
      %v1134 = vadd.f32 %v1132, %v1133
      %1135 = vadd.xlane.f32.xlu0 %v1134
      %v1136 = vpop.xlane.xlu0 %1135
      %v1137 = vadd.f32 %v1068, %v1069
      %v1138 = vsel %vm1087, %v1070, 0.0
      %v1139 = vadd.f32 %v1137, %v1138
      %1140 = vadd.xlane.f32.xlu0 %v1139
      %v1141 = vpop.xlane.xlu0 %1140
      %v1142 = vadd.f32 %v1071, %v1072
      %v1143 = vsel %vm1087, %v1073, 0.0
      %v1144 = vadd.f32 %v1142, %v1143
      %1145 = vadd.xlane.f32.xlu0 %v1144
      %v1146 = vpop.xlane.xlu0 %1145
      %v1147 = vadd.f32 %v1074, %v1075
      %v1148 = vsel %vm1087, %v1076, 0.0
      %v1149 = vadd.f32 %v1147, %v1148
      %1150 = vadd.xlane.f32.xlu0 %v1149
      %v1151 = vpop.xlane.xlu0 %1150
      %v1152 = vadd.f32 %v1077, %v1078
      %v1153 = vsel %vm1087, %v1079, 0.0
      %v1154 = vadd.f32 %v1152, %v1153
      %1155 = vadd.xlane.f32.xlu0 %v1154
      %v1156 = vpop.xlane.xlu0 %1155
      %v1157 = vadd.f32 %v1080, %v1081
      %v1158 = vsel %vm1087, %v1082, 0.0
      %v1159 = vadd.f32 %v1157, %v1158
      %1160 = vadd.xlane.f32.xlu0 %v1159
      %v1161 = vpop.xlane.xlu0 %1160
      %v1162 = vadd.f32 %v1083, %v1084
      %v1163 = vsel %vm1087, %v1085, 0.0
      %v1164 = vadd.f32 %v1162, %v1163
      %1165 = vadd.xlane.f32.xlu0 %v1164
      %v1166 = vpop.xlane.xlu0 %1165
      %vm1167 = vcmask 7168
      %1168 = vst.msk [vmem:[%s242] sm:$0xff] %vm1167, %v1091
      %1169 = vst.msk [vmem:[%s242 + $0x8] sm:$0xff] %vm1167, %v1096
      %1170 = vst.msk [vmem:[%s242 + $0x10] sm:$0xff] %vm1167, %v1101
      %1171 = vst.msk [vmem:[%s242 + $0x18] sm:$0xff] %vm1167, %v1106
      %1172 = vst.msk [vmem:[%s242 + $0x20] sm:$0xff] %vm1167, %v1111
      %1173 = vst.msk [vmem:[%s242 + $0x28] sm:$0xff] %vm1167, %v1116
      %1174 = vst.msk [vmem:[%s242 + $0x30] sm:$0xff] %vm1167, %v1121
      %1175 = vst.msk [vmem:[%s242 + $0x38] sm:$0xff] %vm1167, %v1126
      %1176 = vst.msk [vmem:[%s242 + $0x40] sm:$0xff] %vm1167, %v1131
      %1177 = vst.msk [vmem:[%s242 + $0x48] sm:$0xff] %vm1167, %v1136
      %1178 = vst.msk [vmem:[%s242 + $0x50] sm:$0xff] %vm1167, %v1141
      %1179 = vst.msk [vmem:[%s242 + $0x58] sm:$0xff] %vm1167, %v1146
      %1180 = vst.msk [vmem:[%s242 + $0x60] sm:$0xff] %vm1167, %v1151
      %1181 = vst.msk [vmem:[%s242 + $0x68] sm:$0xff] %vm1167, %v1156
      %1182 = vst.msk [vmem:[%s242 + $0x70] sm:$0xff] %vm1167, %v1161
      %1183 = vst.msk [vmem:[%s242 + $0x78] sm:$0xff] %vm1167, %v1166
      %v1184 = vmul.f32 %v1038, %v1038
      %v1185 = vmul.f32 %v1039, %v1039
      %v1186 = vmul.f32 %v1040, %v1040
      %v1187 = vmul.f32 %v1041, %v1041
      %v1188 = vmul.f32 %v1042, %v1042
      %v1189 = vmul.f32 %v1043, %v1043
      %v1190 = vmul.f32 %v1044, %v1044
      %v1191 = vmul.f32 %v1045, %v1045
      %v1192 = vmul.f32 %v1046, %v1046
      %v1193 = vmul.f32 %v1047, %v1047
      %v1194 = vmul.f32 %v1048, %v1048
      %v1195 = vmul.f32 %v1049, %v1049
      %v1196 = vmul.f32 %v1050, %v1050
      %v1197 = vmul.f32 %v1051, %v1051
      %v1198 = vmul.f32 %v1052, %v1052
      %v1199 = vmul.f32 %v1053, %v1053
      %v1200 = vmul.f32 %v1054, %v1054
      %v1201 = vmul.f32 %v1055, %v1055
      %v1202 = vmul.f32 %v1056, %v1056
      %v1203 = vmul.f32 %v1057, %v1057
      %v1204 = vmul.f32 %v1058, %v1058
      %v1205 = vmul.f32 %v1059, %v1059
      %v1206 = vmul.f32 %v1060, %v1060
      %v1207 = vmul.f32 %v1061, %v1061
      %v1208 = vmul.f32 %v1062, %v1062
      %v1209 = vmul.f32 %v1063, %v1063
      %v1210 = vmul.f32 %v1064, %v1064
      %v1211 = vmul.f32 %v1065, %v1065
      %v1212 = vmul.f32 %v1066, %v1066
      %v1213 = vmul.f32 %v1067, %v1067
      %v1214 = vmul.f32 %v1068, %v1068
      %v1215 = vmul.f32 %v1069, %v1069
      %v1216 = vmul.f32 %v1070, %v1070
      %v1217 = vmul.f32 %v1071, %v1071
      %v1218 = vmul.f32 %v1072, %v1072
      %v1219 = vmul.f32 %v1073, %v1073
      %v1220 = vmul.f32 %v1074, %v1074
      %v1221 = vmul.f32 %v1075, %v1075
      %v1222 = vmul.f32 %v1076, %v1076
      %v1223 = vmul.f32 %v1077, %v1077
      %v1224 = vmul.f32 %v1078, %v1078
      %v1225 = vmul.f32 %v1079, %v1079
      %v1226 = vmul.f32 %v1080, %v1080
      %v1227 = vmul.f32 %v1081, %v1081
      %v1228 = vmul.f32 %v1082, %v1082
      %v1229 = vmul.f32 %v1083, %v1083
      %v1230 = vmul.f32 %v1084, %v1084
      %v1231 = vmul.f32 %v1085, %v1085
      %v1232 = vadd.f32 %v1184, %v1185
      %v1233 = vsel %vm1087, %v1186, 0.0
      %v1234 = vadd.f32 %v1232, %v1233
      %1235 = vadd.xlane.f32.xlu0 %v1234
      %v1236 = vpop.xlane.xlu0 %1235
      %v1237 = vadd.f32 %v1187, %v1188
      %v1238 = vsel %vm1087, %v1189, 0.0
      %v1239 = vadd.f32 %v1237, %v1238
      %1240 = vadd.xlane.f32.xlu0 %v1239
      %v1241 = vpop.xlane.xlu0 %1240
      %v1242 = vadd.f32 %v1190, %v1191
      %v1243 = vsel %vm1087, %v1192, 0.0
      %v1244 = vadd.f32 %v1242, %v1243
      %1245 = vadd.xlane.f32.xlu0 %v1244
      %v1246 = vpop.xlane.xlu0 %1245
      %v1247 = vadd.f32 %v1193, %v1194
      %v1248 = vsel %vm1087, %v1195, 0.0
      %v1249 = vadd.f32 %v1247, %v1248
      %1250 = vadd.xlane.f32.xlu0 %v1249
      %v1251 = vpop.xlane.xlu0 %1250
      %v1252 = vadd.f32 %v1196, %v1197
      %v1253 = vsel %vm1087, %v1198, 0.0
      %v1254 = vadd.f32 %v1252, %v1253
      %1255 = vadd.xlane.f32.xlu0 %v1254
      %v1256 = vpop.xlane.xlu0 %1255
      %v1257 = vadd.f32 %v1199, %v1200
      %v1258 = vsel %vm1087, %v1201, 0.0
      %v1259 = vadd.f32 %v1257, %v1258
      %1260 = vadd.xlane.f32.xlu0 %v1259
      %v1261 = vpop.xlane.xlu0 %1260
      %v1262 = vadd.f32 %v1202, %v1203
      %v1263 = vsel %vm1087, %v1204, 0.0
      %v1264 = vadd.f32 %v1262, %v1263
      %1265 = vadd.xlane.f32.xlu0 %v1264
      %v1266 = vpop.xlane.xlu0 %1265
      %v1267 = vadd.f32 %v1205, %v1206
      %v1268 = vsel %vm1087, %v1207, 0.0
      %v1269 = vadd.f32 %v1267, %v1268
      %1270 = vadd.xlane.f32.xlu0 %v1269
      %v1271 = vpop.xlane.xlu0 %1270
      %v1272 = vadd.f32 %v1208, %v1209
      %v1273 = vsel %vm1087, %v1210, 0.0
      %v1274 = vadd.f32 %v1272, %v1273
      %1275 = vadd.xlane.f32.xlu0 %v1274
      %v1276 = vpop.xlane.xlu0 %1275
      %v1277 = vadd.f32 %v1211, %v1212
      %v1278 = vsel %vm1087, %v1213, 0.0
      %v1279 = vadd.f32 %v1277, %v1278
      %1280 = vadd.xlane.f32.xlu0 %v1279
      %v1281 = vpop.xlane.xlu0 %1280
      %v1282 = vadd.f32 %v1214, %v1215
      %v1283 = vsel %vm1087, %v1216, 0.0
      %v1284 = vadd.f32 %v1282, %v1283
      %1285 = vadd.xlane.f32.xlu0 %v1284
      %v1286 = vpop.xlane.xlu0 %1285
      %v1287 = vadd.f32 %v1217, %v1218
      %v1288 = vsel %vm1087, %v1219, 0.0
      %v1289 = vadd.f32 %v1287, %v1288
      %1290 = vadd.xlane.f32.xlu0 %v1289
      %v1291 = vpop.xlane.xlu0 %1290
      %v1292 = vadd.f32 %v1220, %v1221
      %v1293 = vsel %vm1087, %v1222, 0.0
      %v1294 = vadd.f32 %v1292, %v1293
      %1295 = vadd.xlane.f32.xlu0 %v1294
      %v1296 = vpop.xlane.xlu0 %1295
      %v1297 = vadd.f32 %v1223, %v1224
      %v1298 = vsel %vm1087, %v1225, 0.0
      %v1299 = vadd.f32 %v1297, %v1298
      %1300 = vadd.xlane.f32.xlu0 %v1299
      %v1301 = vpop.xlane.xlu0 %1300
      %v1302 = vadd.f32 %v1226, %v1227
      %v1303 = vsel %vm1087, %v1228, 0.0
      %v1304 = vadd.f32 %v1302, %v1303
      %1305 = vadd.xlane.f32.xlu0 %v1304
      %v1306 = vpop.xlane.xlu0 %1305
      %v1307 = vadd.f32 %v1229, %v1230
      %v1308 = vsel %vm1087, %v1231, 0.0
      %v1309 = vadd.f32 %v1307, %v1308
      %1310 = vadd.xlane.f32.xlu0 %v1309
      %v1311 = vpop.xlane.xlu0 %1310
      %vm1312 = vcmask 15368
      %1313 = vst.msk [vmem:[%s242] sm:$0xff] %vm1312, %v1236
      %1314 = vst.msk [vmem:[%s242 + $0x8] sm:$0xff] %vm1312, %v1241
      %1315 = vst.msk [vmem:[%s242 + $0x10] sm:$0xff] %vm1312, %v1246
      %1316 = vst.msk [vmem:[%s242 + $0x18] sm:$0xff] %vm1312, %v1251
      %1317 = vst.msk [vmem:[%s242 + $0x20] sm:$0xff] %vm1312, %v1256
      %1318 = vst.msk [vmem:[%s242 + $0x28] sm:$0xff] %vm1312, %v1261
      %1319 = vst.msk [vmem:[%s242 + $0x30] sm:$0xff] %vm1312, %v1266
      %1320 = vst.msk [vmem:[%s242 + $0x38] sm:$0xff] %vm1312, %v1271
      %1321 = vst.msk [vmem:[%s242 + $0x40] sm:$0xff] %vm1312, %v1276
      %1322 = vst.msk [vmem:[%s242 + $0x48] sm:$0xff] %vm1312, %v1281
      %1323 = vst.msk [vmem:[%s242 + $0x50] sm:$0xff] %vm1312, %v1286
      %1324 = vst.msk [vmem:[%s242 + $0x58] sm:$0xff] %vm1312, %v1291
      %1325 = vst.msk [vmem:[%s242 + $0x60] sm:$0xff] %vm1312, %v1296
      %1326 = vst.msk [vmem:[%s242 + $0x68] sm:$0xff] %vm1312, %v1301
      %1327 = vst.msk [vmem:[%s242 + $0x70] sm:$0xff] %vm1312, %v1306
      %1328 = vst.msk [vmem:[%s242 + $0x78] sm:$0xff] %vm1312, %v1311
      %v1329 = vpack.c.bf16 %v846, %v846
      %v1330 = vpack.c.bf16 %v848, %v848
      %v1331 = vpack.c.bf16 %v959, %v959
      %v1335 = vunpack.c.l.b16 %v1329
      %v1336 = vunpack.c.l.b16 %v1330
      %v1337 = vunpack.c.l.b16 %v1331
      %v1338 = vpack.c.b16 %v1336, %v1335
      %v1339 = vpack.c.b16 %v1337, %v1337
      %1342 = vst [vmem:[%s233] sm:$0xff] %v1338
      %1343 = vst.msk [vmem:[%s233 + $0x8] sm:$0xf] %vm249, %v1339
      %p1344 = scmp.lt.s32.totalorder %s20, 1
      %s1345 = scalar_select %p1344, %s20, 1
      %p1346 = scmp.lt.s32.totalorder %s21, 0
      %s1347 = scalar_select %p1346, %s21, 0
      %s1348 = smul.addr %s1347, 3
      %s1349 = smul.addr %s1345, 3
      %s1350 = sadd.s32 %s1348, %s1349
      %s1351 = smul.addr %s1350, 4
      %s1352 = scalar_lea.vmem %s3, %s1351
      %p1353 = scmp.lt.s32.totalorder %s20, 1
      %s1354 = scalar_select %p1353, %s20, 1
      %p1355 = scmp.lt.s32.totalorder %s21, 0
      %s1356 = scalar_select %p1355, %s21, 0
      %s1357 = smul.addr %s1356, 16
      %s1358 = smul.addr %s1354, 16
      %s1359 = sadd.s32 %s1357, %s1358
      %s1360 = smul.addr %s1359, 8
      %s1361 = scalar_lea.vmem %s4, %s1360
      // Predicated region
      $region33: #{lightweight_conv2d.2} parent=31 // pred_check
        %p1362 = pneg %p116
      $region34: #{lightweight_conv2d.2} parent=31 // pred_check_branch
        %1364 = sbr.rel (%p1362) target = $region36
      $region35: #{lightweight_conv2d.2} parent=31 // pred_region
        _
      $region36: #{lightweight_conv2d.2} parent=31 // pred_fallthru
        _
      // Predicated region
      $region37: #{lightweight_conv2d.2} parent=31 // pred_check
        %p1365 = pneg %p144
      $region38: #{lightweight_conv2d.2} parent=31 // pred_check_branch
        %1367 = sbr.rel (%p1365) target = $region40
      $region39: #{lightweight_conv2d.2} parent=31 // pred_region
        _
      $region40: #{lightweight_conv2d.2} parent=31 // pred_fallthru
        _
    $region32: #{lightweight_conv2d.2} parent=5 // pred_fallthru
      _
    %p1368 = scmp.le.s32.totalorder 2, %s11
    // Predicated region
    $region41: #{lightweight_conv2d.2} parent=5 // pred_check
      %p1369 = pneg %p1368
    $region42: #{lightweight_conv2d.2} parent=5 // pred_check_branch
      %1371 = sbr.rel (%p1369) target = $region44
    $region43: #{lightweight_conv2d.2} parent=5 // pred_region
      %s1372 = ssub.s32 %s11, 2
      // Predicated region
      $region45: #{lightweight_conv2d.2} parent=43 // pred_check
        %p1373 = pneg %p122
      $region46: #{lightweight_conv2d.2} parent=43 // pred_check_branch
        %1375 = sbr.rel (%p1373) target = $region48
      $region47: #{lightweight_conv2d.2} parent=43 // pred_region
        %p1376 = scmp.lt.s32.totalorder %s22, 1
        %s1377 = scalar_select %p1376, %s22, 1
        %p1378 = scmp.lt.s32.totalorder %s23, 0
        %s1379 = scalar_select %p1378, %s23, 0
        %s1380 = smul.addr %s1379, 3
        %s1381 = smul.addr %s1377, 3
        %s1382 = sadd.s32 %s1380, %s1381
        %s1383 = smul.addr %s1382, 4
        %s1384 = scalar_lea.vmem %s3, %s1383
      $region48: #{lightweight_conv2d.2} parent=43 // pred_fallthru
        _
      // Predicated region
      $region49: #{lightweight_conv2d.2} parent=43 // pred_check
        %p1385 = pneg %p150
      $region50: #{lightweight_conv2d.2} parent=43 // pred_check_branch
        %1387 = sbr.rel (%p1385) target = $region52
      $region51: #{lightweight_conv2d.2} parent=43 // pred_region
        %p1388 = scmp.lt.s32.totalorder %s22, 1
        %s1389 = scalar_select %p1388, %s22, 1
        %p1390 = scmp.lt.s32.totalorder %s23, 0
        %s1391 = scalar_select %p1390, %s23, 0
        %s1392 = smul.addr %s1391, 16
        %s1393 = smul.addr %s1389, 16
        %s1394 = sadd.s32 %s1392, %s1393
        %s1395 = smul.addr %s1394, 8
        %s1396 = scalar_lea.vmem %s4, %s1395
      $region52: #{lightweight_conv2d.2} parent=43 // pred_fallthru
        _
    $region44: #{lightweight_conv2d.2} parent=5 // pred_fallthru
      _
  $region6: #{lightweight_conv2d.2} parent=0 // loop_footer
    %s15 = sadd.s32 1, %s11
  $region7: #{lightweight_conv2d.2} parent=0 // loop_footer_branch
    %10 = sbr.rel target = $region3
  $region8: #{lightweight_conv2d.2} parent=0 // loop_exit
    _

</llo_original>
